<compile_context>
chip_gen: v7x
topology: tpu7x:2x2x1
jax: 0.10.0
libtpu: 0.0.40
codegen_flags: <defaults>
</compile_context>

<pallas_src>
import functools

import jax
import jax.numpy as jnp
from jax import lax
from jax.experimental import pallas as pl
from jax.experimental.pallas import tpu as pltpu

BN_EPS = 1e-5
_EDGE_TILE = 128   # raise to 256-512 at large E to amortize per-tile overheads


def _round_up(v, m):
    return (v + m - 1) // m * m


def _vmem_limit_bytes():
    cap = 128 * 1024 * 1024
    try:
        cap = int(pltpu.get_tpu_info().vmem_capacity_bytes)
    except Exception:
        pass  # fall back to a conservative default if the query is unavailable
    return int(max(32 * 1024 * 1024, min(cap * 3 // 4, 112 * 1024 * 1024)))


def vgn_layers_kernel(eps_ref, x0_hbm_ref, ea_ref, src_ref, dst_ref,
                      w1_ref, w2_ref, vec_ref, mstack_ref,
                      out_ref, agg_ref, *, inv_n, num_layers):
    """Grid = (layer, edge_tile). out_ref carries x across layers; agg_ref
    accumulates the GINEConv aggregation across edge tiles."""
    layer = pl.program_id(0)
    tile = pl.program_id(1)
    last_tile = pl.num_programs(1) - 1
    f32, bf16 = jnp.float32, jnp.bfloat16

    # x0 lives in HBM; DMA it once into the resident output carry.
    @pl.when(jnp.logical_and(layer == 0, tile == 0))
    def _():
        pltpu.sync_copy(x0_hbm_ref, out_ref)

    # New layer -> reset the aggregation accumulator.
    @pl.when(tile == 0)
    def _():
        agg_ref[...] = jnp.zeros_like(agg_ref)

    x = out_ref[...]                       # (Np, Dp) f32, layer-carried
    te = src_ref.shape[0]
    np_ = x.shape[0]

    # ---- GINEConv message passing for this edge tile --------------------
    # Gather x_src: build a compact (TE, Np) one-hot from the int32 indices
    # (padded edges carry index Np -> all-zero row -> no contribution).
    src_idx = src_ref[...]                                    # (TE, 1) int32
    oh_src = jnp.where(
        lax.broadcasted_iota(jnp.int32, (te, np_), 1) == src_idx,
        1.0, 0.0).astype(bf16)                                # (TE, Np)
    xs = jnp.dot(oh_src, x.astype(bf16),
                 preferred_element_type=f32)                  # (TE, Dp)

    # Edge message in bf16 (it feeds a bf16 MXU operand anyway).
    msg = jnp.maximum(xs.astype(bf16) + ea_ref[...], 0.0)     # (TE, Dp) bf16

    # Scatter-add by dst: (Np, TE) one-hot built on the fly, f32 accumulate.
    dst_idx = dst_ref[...]                                    # (1, TE) int32
    oh_dst = jnp.where(
        lax.broadcasted_iota(jnp.int32, (np_, te), 0) == dst_idx,
        1.0, 0.0).astype(bf16)                                # (Np, TE)
    agg_ref[...] += jnp.dot(oh_dst, msg, preferred_element_type=f32)

    # ---- Layer tail: MLP + residual + BatchNorm + ReLU (last tile only) --
    @pl.when(tile == last_tile)
    def _():
        eps = eps_ref[layer]
        h = (1.0 + eps) * x + agg_ref[...]

        b1 = vec_ref[0:1, :]
        b2 = vec_ref[1:2, :]
        gamma = vec_ref[2:3, :]
        beta = vec_ref[3:4, :]

        h1 = jnp.maximum(
            jnp.dot(h.astype(bf16), w1_ref[...],
                    preferred_element_type=f32) + b1, 0.0)
        h2 = jnp.dot(h1.astype(bf16), w2_ref[...],
                     preferred_element_type=f32) + b2

        # Select this layer's residual-mask column and the node-validity
        # column from the resident lane-dense mask slab.
        mc = mstack_ref.shape[1]
        col_ids = lax.broadcasted_iota(jnp.int32, (1, mc), 1)
        sel_l = jnp.where(col_ids == layer, 1.0, 0.0)
        sel_n = jnp.where(col_ids == num_layers, 1.0, 0.0)
        mstack = mstack_ref[...]
        res_mask = jnp.sum(mstack * sel_l, axis=1, keepdims=True)    # (Np, 1)
        node_mask = jnp.sum(mstack * sel_n, axis=1, keepdims=True)   # (Np, 1)

        # Residual: einsum('i,ij->ij', scaling*masks[layer], h2) + x_in.
        y = res_mask * h2 + x     # padded rows are exactly zero

        # BatchNorm1d (training-mode batch stats over the N real nodes;
        # padded rows of y are zero so the sums are exact without masking).
        mean = jnp.sum(y, axis=0, keepdims=True) * inv_n
        var = jnp.sum(y * y, axis=0, keepdims=True) * inv_n - mean * mean
        scale = gamma * lax.rsqrt(var + BN_EPS)
        shift = beta - mean * scale

        # ReLU (dropout p=0.0 is a no-op); re-zero padded node rows.
        out_ref[...] = jnp.maximum(y * scale + shift, 0.0) * node_mask


@jax.jit
def vgn_forward(x, edge_attr, src, dst, masks, params, scaling):
    """Full VGNConvLayer_v2 forward: all layers fused in one Pallas call."""
    N, D = x.shape
    E = edge_attr.shape[0]
    L = len(params)
    f32, bf16, i32 = jnp.float32, jnp.bfloat16, jnp.int32

    TE = _EDGE_TILE
    Np = _round_up(N, 128)
    Dp = _round_up(D, 128)
    Ep = _round_up(E, TE)
    EB = Ep // TE
    MC = _round_up(L + 1, 128)   # mask-slab columns: L residual masks + node mask
    assert L < MC

    # --- host-side packing / padding (no one-hot matrices anymore) -------
    x_p = jnp.zeros((Np, Dp), f32).at[:N, :D].set(x.astype(f32))
    ea_p = jnp.zeros((Ep, Dp), bf16).at[:E, :D].set(edge_attr.astype(bf16))
    # Padded edges get index Np (out of range -> zero one-hot row/col).
    src_p = jnp.full((Ep, 1), Np, i32).at[:E, 0].set(src.astype(i32))
    dst_p = jnp.full((1, Ep), Np, i32).at[0, :E].set(dst.astype(i32))

    stack = lambda k: jnp.stack([p[k] for p in params])
    w1_s = jnp.zeros((L, Dp, Dp), bf16).at[:, :D, :D].set(stack("w1").astype(bf16))
    w2_s = jnp.zeros((L, Dp, Dp), bf16).at[:, :D, :D].set(stack("w2").astype(bf16))

    # Pack the small per-layer vectors into one (L, 8, Dp) slab:
    # row 0 = b1, 1 = b2, 2 = gamma, 3 = beta (rows 4..7 are padding).
    vec_s = jnp.zeros((L, 8, Dp), f32)
    vec_s = vec_s.at[:, 0, :D].set(stack("b1").reshape(L, D).astype(f32))
    vec_s = vec_s.at[:, 1, :D].set(stack("b2").reshape(L, D).astype(f32))
    vec_s = vec_s.at[:, 2, :D].set(stack("gamma").reshape(L, D).astype(f32))
    vec_s = vec_s.at[:, 3, :D].set(stack("beta").reshape(L, D).astype(f32))
    eps_s = stack("eps").reshape(L).astype(f32)               # (L,) in SMEM

    # Lane-dense resident mask slab: columns 0..L-1 = scaling*masks[layer],
    # column L = node-validity mask (1.0 for real nodes).
    mstack = jnp.zeros((Np, MC), f32)
    mstack = mstack.at[:N, :L].set((scaling * masks).T.astype(f32))
    mstack = mstack.at[:N, L].set(1.0)

    kernel = functools.partial(vgn_layers_kernel, inv_n=1.0 / N, num_layers=L)

    per_layer_mat = pl.BlockSpec((None, Dp, Dp), lambda l, c: (l, 0, 0))

    out_p = pl.pallas_call(
        kernel,
        out_shape=jax.ShapeDtypeStruct((Np, Dp), f32),
        grid=(L, EB),
        in_specs=[
            pl.BlockSpec(memory_space=pltpu.MemorySpace.SMEM),       # eps (L,)
            pl.BlockSpec(memory_space=pl.ANY),                       # x0 stays in HBM
            pl.BlockSpec((TE, Dp), lambda l, c: (c, 0)),             # edge_attr tile (bf16)
            pl.BlockSpec((TE, 1), lambda l, c: (c, 0)),              # src indices tile
            pl.BlockSpec((1, TE), lambda l, c: (0, c)),              # dst indices tile
            per_layer_mat,                                           # W1 (bf16)
            per_layer_mat,                                           # W2 (bf16)
            pl.BlockSpec((None, 8, Dp), lambda l, c: (l, 0, 0)),     # packed b1/b2/gamma/beta
            pl.BlockSpec((Np, MC), lambda l, c: (0, 0)),             # resident mask slab
        ],
        out_specs=pl.BlockSpec((Np, Dp), lambda l, c: (0, 0)),       # x carry (resident)
        scratch_shapes=[pltpu.VMEM((Np, Dp), jnp.float32)],          # agg accumulator
        compiler_params=pltpu.CompilerParams(
            dimension_semantics=("arbitrary", "arbitrary"),
            vmem_limit_bytes=_vmem_limit_bytes()),
    )(eps_s, x_p, ea_p, src_p, dst_p, w1_s, w2_s, vec_s, mstack)

    return out_p[:N, :D]


def ref_forward(x, edge_attr, src, dst, masks, params, scaling):
    """Pure-JAX reference mirroring the kernel's mixed-precision policy
    (bf16 MXU operands + bf16 edge message, f32 accumulation)."""
    f32, bf16 = jnp.float32, jnp.bfloat16
    masks_scaled = scaling * masks
    for layer, p in enumerate(params):
        x_in = x
        msg = jnp.maximum(x[src].astype(bf16) + edge_attr.astype(bf16), 0.0)
        agg = jnp.zeros_like(x).at[dst].add(msg.astype(f32))
        h = (1.0 + p["eps"][0]) * x + agg
        h1 = jnp.maximum(jnp.dot(h.astype(bf16), p["w1"].astype(bf16),
                                 preferred_element_type=f32) + p["b1"], 0.0)
        h2 = jnp.dot(h1.astype(bf16), p["w2"].astype(bf16),
                     preferred_element_type=f32) + p["b2"]
        y = masks_scaled[layer][:, None] * h2 + x_in
        mean = y.mean(axis=0, keepdims=True)
        var = ((y - mean) ** 2).mean(axis=0, keepdims=True)
        y = p["gamma"] * (y - mean) * jax.lax.rsqrt(var + BN_EPS) + p["beta"]
        x = jnp.maximum(y, 0.0)
    return x


if __name__ == "__main__":
    # Small synthetic graph; dim_in == dim_hidden (required by GINEConv with a
    # shared edge_attr + the residual add).  Sizes deliberately NOT multiples
    # of 128, and E spans several edge tiles, to exercise padding + the tiled
    # aggregation path.
    N, E, D = 48, 300, 96
    NUM_LAYERS = 3
    SCALING = 0.5

    key = jax.random.PRNGKey(0)
    keys = jax.random.split(key, 5 + NUM_LAYERS)

    x = jax.random.normal(keys[0], (N, D), jnp.float32)
    edge_attr = jax.random.normal(keys[1], (E, D), jnp.float32)
    src = jax.random.randint(keys[2], (E,), 0, N)
    dst = jax.random.randint(keys[3], (E,), 0, N)
    masks = jax.random.uniform(keys[4], (NUM_LAYERS, N), jnp.float32)

    params = []
    for layer in range(NUM_LAYERS):
        kw = jax.random.split(keys[5 + layer], 6)
        params.append({
            "w1": jax.random.normal(kw[0], (D, D), jnp.float32) * 0.1,
            "b1": jax.random.normal(kw[1], (1, D), jnp.float32) * 0.1,
            "w2": jax.random.normal(kw[2], (D, D), jnp.float32) * 0.1,
            "b2": jax.random.normal(kw[3], (1, D), jnp.float32) * 0.1,
            "eps": jnp.array([0.1 * (layer + 1)], jnp.float32),  # train_eps=True
            "gamma": jax.random.uniform(kw[4], (1, D), jnp.float32,
                                        minval=0.5, maxval=1.5),
            "beta": jax.random.normal(kw[5], (1, D), jnp.float32) * 0.1,
        })

    out = vgn_forward(x, edge_attr, src, dst, masks, params, SCALING)
    out = jax.block_until_ready(out)
    assert out.shape == (N, D)
    assert bool(jnp.all(jnp.isfinite(out)))

    ref = ref_forward(x, edge_attr, src, dst, masks, params, SCALING)
    max_err = jnp.max(jnp.abs(out - ref))
    assert jnp.allclose(out, ref, rtol=2e-3, atol=2e-3), f"max abs err {max_err}"

    print("KERNEL_OK")
</pallas_src>

<mosaic_0001>
module attributes {stable_mosaic.version = 11 : i64} {
  func.func @vgn_layers_kernel(%arg0: i32, %arg1: i32, %arg2: memref<3xf32, #tpu.memory_space<smem>>, %arg3: memref<128x128xf32, #tpu.memory_space<any>>, %arg4: memref<128x128xbf16, #tpu.memory_space<vmem>>, %arg5: memref<128x1xi32, #tpu.memory_space<vmem>>, %arg6: memref<1x128xi32, #tpu.memory_space<vmem>>, %arg7: memref<1x128x128xbf16, #tpu.memory_space<vmem>>, %arg8: memref<1x128x128xbf16, #tpu.memory_space<vmem>>, %arg9: memref<1x8x128xf32, #tpu.memory_space<vmem>>, %arg10: memref<128x128xf32, #tpu.memory_space<vmem>>, %arg11: memref<128x128xf32, #tpu.memory_space<vmem>>, %arg12: memref<128x128xf32, #tpu.memory_space<vmem>>) attributes {dimension_semantics = [#tpu.dimension_semantics<arbitrary>, #tpu.dimension_semantics<arbitrary>], iteration_bounds = array<i64: 3, 3>, scalar_prefetch = 0 : i64, scratch_operands = 1 : i64, tpu.core_type = #tpu.core_type<tc>, window_params = [{transform_indices = @transform_0, window_bounds = array<i64: 3>}, {}, {transform_indices = @transform_2, window_bounds = array<i64: 128, 128>}, {transform_indices = @transform_3, window_bounds = array<i64: 128, 1>}, {transform_indices = @transform_4, window_bounds = array<i64: 1, 128>}, {transform_indices = @transform_5, window_bounds = array<i64: 1, 128, 128>}, {transform_indices = @transform_6, window_bounds = array<i64: 1, 128, 128>}, {transform_indices = @transform_7, window_bounds = array<i64: 1, 8, 128>}, {pipeline_mode = #tpu.pipeline_mode<synchronous>, transform_indices = @transform_8, window_bounds = array<i64: 128, 128>}, {pipeline_mode = #tpu.pipeline_mode<synchronous>, transform_indices = @transform_9, window_bounds = array<i64: 128, 128>}]} {
    %c0_i32 = arith.constant 0 : i32
    %0 = arith.cmpi eq, %arg0, %c0_i32 : i32
    %c0_i32_0 = arith.constant 0 : i32
    %1 = arith.cmpi eq, %arg1, %c0_i32_0 : i32
    %2 = arith.andi %0, %1 : i1
    %3 = arith.extui %2 : i1 to i32
    %c0_i32_1 = arith.constant 0 : i32
    %4 = arith.cmpi ne, %3, %c0_i32_1 : i32
    scf.if %4 {
      "tpu.region"() ({
        %39 = tpu.sem_alloc : memref<!tpu.dma_semaphore, #tpu.memory_space<semaphore_mem>>
        tpu.enqueue_dma source(%arg3 : memref<128x128xf32, #tpu.memory_space<any>>) target(%arg11 : memref<128x128xf32, #tpu.memory_space<vmem>>) target_semaphore(%39 : memref<!tpu.dma_semaphore, #tpu.memory_space<semaphore_mem>>)
        tpu.wait_dma2 semaphore(%39 : memref<!tpu.dma_semaphore, #tpu.memory_space<semaphore_mem>>) src(%arg3 : memref<128x128xf32, #tpu.memory_space<any>>) dst(%arg11 : memref<128x128xf32, #tpu.memory_space<vmem>>)
        tpu.yield
      }) : () -> ()
    } else {
    }
    %c0_i32_2 = arith.constant 0 : i32
    %5 = arith.cmpi eq, %arg1, %c0_i32_2 : i32
    %6 = arith.extui %5 : i1 to i32
    %c0_i32_3 = arith.constant 0 : i32
    %7 = arith.cmpi ne, %6, %c0_i32_3 : i32
    scf.if %7 {
      %cst_22 = arith.constant 0.000000e+00 : f32
      %39 = vector.broadcast %cst_22 : f32 to vector<128x128xf32>
      %c0_23 = arith.constant 0 : index
      %c0_24 = arith.constant 0 : index
      %40 = vector.load %arg12[%c0_23, %c0_24] : memref<128x128xf32, #tpu.memory_space<vmem>>, vector<128x128xf32>
      tpu.vector_store %arg12[%c0_23, %c0_24], %39 {strides = array<i32>} : memref<128x128xf32, #tpu.memory_space<vmem>>, vector<128x128xf32>,
    } else {
    }
    %c0 = arith.constant 0 : index
    %c0_4 = arith.constant 0 : index
    %8 = vector.load %arg11[%c0, %c0_4] : memref<128x128xf32, #tpu.memory_space<vmem>>, vector<128x128xf32>
    %c0_5 = arith.constant 0 : index
    %c0_6 = arith.constant 0 : index
    %9 = vector.load %arg5[%c0_5, %c0_6] : memref<128x1xi32, #tpu.memory_space<vmem>>, vector<128x1xi32>
    %10 = tpu.iota {dimensions = array<i32: 1>} : vector<128x128xi32>
    %11 = vector.broadcast %9 : vector<128x1xi32> to vector<128x128xi32>
    %12 = arith.cmpi eq, %10, %11 : vector<128x128xi32>
    %cst = arith.constant 1.000000e+00 : f32
    %cst_7 = arith.constant 0.000000e+00 : f32
    %13 = vector.broadcast %cst : f32 to vector<128x128xf32>
    %14 = vector.broadcast %cst_7 : f32 to vector<128x128xf32>
    %15 = arith.select %12, %13, %14 : vector<128x128xi1>, vector<128x128xf32>
    %16 = arith.truncf %15 : vector<128x128xf32> to vector<128x128xbf16>
    %17 = arith.truncf %8 : vector<128x128xf32> to vector<128x128xbf16>
    %cst_8 = arith.constant dense<0.000000e+00> : vector<128x128xf32>
    %18 = tpu.matmul %16, %17, %cst_8 {dimension_numbers = #tpu.dot_dimension_numbers<[1], [0], [0], [1], [0, 0, 1, 1], [], []>} : vector<128x128xbf16>, vector<128x128xbf16>, vector<128x128xf32> -> vector<128x128xf32>
    %19 = arith.truncf %18 : vector<128x128xf32> to vector<128x128xbf16>
    %c0_9 = arith.constant 0 : index
    %c0_10 = arith.constant 0 : index
    %20 = vector.load %arg4[%c0_9, %c0_10] : memref<128x128xbf16, #tpu.memory_space<vmem>>, vector<128x128xbf16>
    %21 = arith.addf %19, %20 : vector<128x128xbf16>
    %cst_11 = arith.constant 0.000000e+00 : bf16
    %22 = vector.broadcast %cst_11 : bf16 to vector<128x128xbf16>
    %23 = arith.maximumf %21, %22 : vector<128x128xbf16>
    %c0_12 = arith.constant 0 : index
    %c0_13 = arith.constant 0 : index
    %24 = vector.load %arg6[%c0_12, %c0_13] : memref<1x128xi32, #tpu.memory_space<vmem>>, vector<1x128xi32>
    %25 = tpu.iota {dimensions = array<i32: 0>} : vector<128x128xi32>
    %26 = vector.broadcast %24 : vector<1x128xi32> to vector<128x128xi32>
    %27 = arith.cmpi eq, %25, %26 : vector<128x128xi32>
    %cst_14 = arith.constant 1.000000e+00 : f32
    %cst_15 = arith.constant 0.000000e+00 : f32
    %28 = vector.broadcast %cst_14 : f32 to vector<128x128xf32>
    %29 = vector.broadcast %cst_15 : f32 to vector<128x128xf32>
    %30 = arith.select %27, %28, %29 : vector<128x128xi1>, vector<128x128xf32>
    %31 = arith.truncf %30 : vector<128x128xf32> to vector<128x128xbf16>
    %c0_16 = arith.constant 0 : index
    %c0_17 = arith.constant 0 : index
    %32 = vector.load %arg12[%c0_16, %c0_17] : memref<128x128xf32, #tpu.memory_space<vmem>>, vector<128x128xf32>
    %cst_18 = arith.constant dense<0.000000e+00> : vector<128x128xf32>
    %33 = tpu.matmul %31, %23, %cst_18 {dimension_numbers = #tpu.dot_dimension_numbers<[1], [0], [0], [1], [0, 0, 1, 1], [], []>} : vector<128x128xbf16>, vector<128x128xbf16>, vector<128x128xf32> -> vector<128x128xf32>
    %34 = arith.addf %32, %33 : vector<128x128xf32>
    %c0_19 = arith.constant 0 : index
    %c0_20 = arith.constant 0 : index
    %35 = vector.load %arg12[%c0_19, %c0_20] : memref<128x128xf32, #tpu.memory_space<vmem>>, vector<128x128xf32>
    tpu.vector_store %arg12[%c0_19, %c0_20], %34 {strides = array<i32>} : memref<128x128xf32, #tpu.memory_space<vmem>>, vector<128x128xf32>,
    %c2_i32 = arith.constant 2 : i32
    %36 = arith.cmpi eq, %arg1, %c2_i32 : i32
    %37 = arith.extui %36 : i1 to i32
    %c0_i32_21 = arith.constant 0 : i32
    %38 = arith.cmpi ne, %37, %c0_i32_21 : i32
    scf.if %38 {
      %39 = arith.index_cast %arg0 : i32 to index
      %40 = memref.load %arg2[%39] : memref<3xf32, #tpu.memory_space<smem>>
      %cst_22 = arith.constant 1.000000e+00 : f32
      %41 = arith.addf %cst_22, %40 : f32
      %42 = vector.broadcast %41 : f32 to vector<128x128xf32>
      %43 = arith.mulf %42, %8 : vector<128x128xf32>
      %c0_23 = arith.constant 0 : index
      %c0_24 = arith.constant 0 : index
      %44 = vector.load %arg12[%c0_23, %c0_24] : memref<128x128xf32, #tpu.memory_space<vmem>>, vector<128x128xf32>
      %45 = arith.addf %43, %44 : vector<128x128xf32>
      %c0_25 = arith.constant 0 : index
      %c0_26 = arith.constant 0 : index
      %c0_27 = arith.constant 0 : index
      %46 = vector.load %arg9[%c0_25, %c0_26, %c0_27] : memref<1x8x128xf32, #tpu.memory_space<vmem>>, vector<1x1x128xf32>
      %47 = vector.shape_cast %46 : vector<1x1x128xf32> to vector<1x128xf32>
      %c0_28 = arith.constant 0 : index
      %c1 = arith.constant 1 : index
      %c0_29 = arith.constant 0 : index
      %48 = vector.load %arg9[%c0_28, %c1, %c0_29] : memref<1x8x128xf32, #tpu.memory_space<vmem>>, vector<1x1x128xf32>
      %49 = vector.shape_cast %48 : vector<1x1x128xf32> to vector<1x128xf32>
      %c0_30 = arith.constant 0 : index
      %c2 = arith.constant 2 : index
      %c0_31 = arith.constant 0 : index
      %50 = vector.load %arg9[%c0_30, %c2, %c0_31] : memref<1x8x128xf32, #tpu.memory_space<vmem>>, vector<1x1x128xf32>
      %51 = vector.shape_cast %50 : vector<1x1x128xf32> to vector<1x128xf32>
      %c0_32 = arith.constant 0 : index
      %c3 = arith.constant 3 : index
      %c0_33 = arith.constant 0 : index
      %52 = vector.load %arg9[%c0_32, %c3, %c0_33] : memref<1x8x128xf32, #tpu.memory_space<vmem>>, vector<1x1x128xf32>
      %53 = vector.shape_cast %52 : vector<1x1x128xf32> to vector<1x128xf32>
      %54 = arith.truncf %45 : vector<128x128xf32> to vector<128x128xbf16>
      %c0_34 = arith.constant 0 : index
      %c0_35 = arith.constant 0 : index
      %c0_36 = arith.constant 0 : index
      %55 = vector.load %arg7[%c0_34, %c0_35, %c0_36] : memref<1x128x128xbf16, #tpu.memory_space<vmem>>, vector<1x128x128xbf16>
      %56 = vector.shape_cast %55 : vector<1x128x128xbf16> to vector<128x128xbf16>
      %cst_37 = arith.constant dense<0.000000e+00> : vector<128x128xf32>
      %57 = tpu.matmul %54, %56, %cst_37 {dimension_numbers = #tpu.dot_dimension_numbers<[1], [0], [0], [1], [0, 0, 1, 1], [], []>} : vector<128x128xbf16>, vector<128x128xbf16>, vector<128x128xf32> -> vector<128x128xf32>
      %58 = vector.broadcast %47 : vector<1x128xf32> to vector<128x128xf32>
      %59 = arith.addf %57, %58 : vector<128x128xf32>
      %cst_38 = arith.constant 0.000000e+00 : f32
      %60 = vector.broadcast %cst_38 : f32 to vector<128x128xf32>
      %61 = arith.maximumf %59, %60 : vector<128x128xf32>
      %62 = arith.truncf %61 : vector<128x128xf32> to vector<128x128xbf16>
      %c0_39 = arith.constant 0 : index
      %c0_40 = arith.constant 0 : index
      %c0_41 = arith.constant 0 : index
      %63 = vector.load %arg8[%c0_39, %c0_40, %c0_41] : memref<1x128x128xbf16, #tpu.memory_space<vmem>>, vector<1x128x128xbf16>
      %64 = vector.shape_cast %63 : vector<1x128x128xbf16> to vector<128x128xbf16>
      %cst_42 = arith.constant dense<0.000000e+00> : vector<128x128xf32>
      %65 = tpu.matmul %62, %64, %cst_42 {dimension_numbers = #tpu.dot_dimension_numbers<[1], [0], [0], [1], [0, 0, 1, 1], [], []>} : vector<128x128xbf16>, vector<128x128xbf16>, vector<128x128xf32> -> vector<128x128xf32>
      %66 = vector.broadcast %49 : vector<1x128xf32> to vector<128x128xf32>
      %67 = arith.addf %65, %66 : vector<128x128xf32>
      %68 = tpu.iota {dimensions = array<i32: 1>} : vector<1x128xi32>
      %69 = vector.broadcast %arg0 : i32 to vector<1x128xi32>
      %70 = arith.cmpi eq, %68, %69 : vector<1x128xi32>
      %cst_43 = arith.constant 1.000000e+00 : f32
      %cst_44 = arith.constant 0.000000e+00 : f32
      %71 = vector.broadcast %cst_43 : f32 to vector<1x128xf32>
      %72 = vector.broadcast %cst_44 : f32 to vector<1x128xf32>
      %73 = arith.select %70, %71, %72 : vector<1x128xi1>, vector<1x128xf32>
      %c3_i32 = arith.constant 3 : i32
      %74 = vector.broadcast %c3_i32 : i32 to vector<1x128xi32>
      %75 = arith.cmpi eq, %68, %74 : vector<1x128xi32>
      %cst_45 = arith.constant 1.000000e+00 : f32
      %cst_46 = arith.constant 0.000000e+00 : f32
      %76 = vector.broadcast %cst_45 : f32 to vector<1x128xf32>
      %77 = vector.broadcast %cst_46 : f32 to vector<1x128xf32>
      %78 = arith.select %75, %76, %77 : vector<1x128xi1>, vector<1x128xf32>
      %c0_47 = arith.constant 0 : index
      %c0_48 = arith.constant 0 : index
      %79 = vector.load %arg10[%c0_47, %c0_48] : memref<128x128xf32, #tpu.memory_space<vmem>>, vector<128x128xf32>
      %80 = vector.broadcast %73 : vector<1x128xf32> to vector<128x128xf32>
      %81 = arith.mulf %79, %80 : vector<128x128xf32>
      %cst_49 = arith.constant dense<0.000000e+00> : vector<128xf32>
      %82 = vector.multi_reduction <add>, %81, %cst_49 [1] : vector<128x128xf32> to vector<128xf32>
      %83 = vector.shape_cast %82 : vector<128xf32> to vector<128x1xf32>
      %84 = vector.broadcast %78 : vector<1x128xf32> to vector<128x128xf32>
      %85 = arith.mulf %79, %84 : vector<128x128xf32>
      %cst_50 = arith.constant dense<0.000000e+00> : vector<128xf32>
      %86 = vector.multi_reduction <add>, %85, %cst_50 [1] : vector<128x128xf32> to vector<128xf32>
      %87 = vector.shape_cast %86 : vector<128xf32> to vector<128x1xf32>
      %88 = vector.broadcast %83 : vector<128x1xf32> to vector<128x128xf32>
      %89 = arith.mulf %88, %67 : vector<128x128xf32>
      %90 = arith.addf %89, %8 : vector<128x128xf32>
      %cst_51 = arith.constant dense<0.000000e+00> : vector<128xf32>
      %91 = vector.multi_reduction <add>, %90, %cst_51 [0] : vector<128x128xf32> to vector<128xf32>
      %92 = vector.shape_cast %91 : vector<128xf32> to vector<1x128xf32>
      %cst_52 = arith.constant 0.020833334 : f32
      %93 = vector.broadcast %cst_52 : f32 to vector<1x128xf32>
      %94 = arith.mulf %92, %93 : vector<1x128xf32>
      %95 = arith.mulf %90, %90 : vector<128x128xf32>
      %cst_53 = arith.constant dense<0.000000e+00> : vector<128xf32>
      %96 = vector.multi_reduction <add>, %95, %cst_53 [0] : vector<128x128xf32> to vector<128xf32>
      %97 = vector.shape_cast %96 : vector<128xf32> to vector<1x128xf32>
      %cst_54 = arith.constant 0.020833334 : f32
      %98 = vector.broadcast %cst_54 : f32 to vector<1x128xf32>
      %99 = arith.mulf %97, %98 : vector<1x128xf32>
      %100 = arith.mulf %94, %94 : vector<1x128xf32>
      %101 = arith.subf %99, %100 : vector<1x128xf32>
      %cst_55 = arith.constant 9.99999974E-6 : f32
      %102 = vector.broadcast %cst_55 : f32 to vector<1x128xf32>
      %103 = arith.addf %101, %102 : vector<1x128xf32>
      %104 = math.rsqrt %103 : vector<1x128xf32>
      %105 = arith.mulf %51, %104 : vector<1x128xf32>
      %106 = arith.mulf %94, %105 : vector<1x128xf32>
      %107 = arith.subf %53, %106 : vector<1x128xf32>
      %108 = vector.broadcast %105 : vector<1x128xf32> to vector<128x128xf32>
      %109 = arith.mulf %90, %108 : vector<128x128xf32>
      %110 = vector.broadcast %107 : vector<1x128xf32> to vector<128x128xf32>
      %111 = arith.addf %109, %110 : vector<128x128xf32>
      %cst_56 = arith.constant 0.000000e+00 : f32
      %112 = vector.broadcast %cst_56 : f32 to vector<128x128xf32>
      %113 = arith.maximumf %111, %112 : vector<128x128xf32>
      %114 = vector.broadcast %87 : vector<128x1xf32> to vector<128x128xf32>
      %115 = arith.mulf %113, %114 : vector<128x128xf32>
      %c0_57 = arith.constant 0 : index
      %c0_58 = arith.constant 0 : index
      %116 = vector.load %arg11[%c0_57, %c0_58] : memref<128x128xf32, #tpu.memory_space<vmem>>, vector<128x128xf32>
      tpu.vector_store %arg11[%c0_57, %c0_58], %115 {strides = array<i32>} : memref<128x128xf32, #tpu.memory_space<vmem>>, vector<128x128xf32>,
    } else {
    }
    return
  }
  func.func @transform_0(%arg0: i32, %arg1: i32) -> i32 {
    %c0_i32 = arith.constant 0 : i32
    %c0_i32_0 = arith.constant 0 : i32
    return %c0_i32 : i32
  }
  func.func @transform_2(%arg0: i32, %arg1: i32) -> (i32, i32) {
    %c0_i32 = arith.constant 0 : i32
    %c0_i32_0 = arith.constant 0 : i32
    return %arg1, %c0_i32 : i32, i32
  }
  func.func @transform_3(%arg0: i32, %arg1: i32) -> (i32, i32) {
    %c0_i32 = arith.constant 0 : i32
    %c0_i32_0 = arith.constant 0 : i32
    return %arg1, %c0_i32 : i32, i32
  }
  func.func @transform_4(%arg0: i32, %arg1: i32) -> (i32, i32) {
    %c0_i32 = arith.constant 0 : i32
    %c0_i32_0 = arith.constant 0 : i32
    return %c0_i32, %arg1 : i32, i32
  }
  func.func @transform_5(%arg0: i32, %arg1: i32) -> (i32, i32, i32) {
    %c0_i32 = arith.constant 0 : i32
    %c0_i32_0 = arith.constant 0 : i32
    %c0_i32_1 = arith.constant 0 : i32
    return %arg0, %c0_i32, %c0_i32_0 : i32, i32, i32
  }
  func.func @transform_6(%arg0: i32, %arg1: i32) -> (i32, i32, i32) {
    %c0_i32 = arith.constant 0 : i32
    %c0_i32_0 = arith.constant 0 : i32
    %c0_i32_1 = arith.constant 0 : i32
    return %arg0, %c0_i32, %c0_i32_0 : i32, i32, i32
  }
  func.func @transform_7(%arg0: i32, %arg1: i32) -> (i32, i32, i32) {
    %c0_i32 = arith.constant 0 : i32
    %c0_i32_0 = arith.constant 0 : i32
    %c0_i32_1 = arith.constant 0 : i32
    return %arg0, %c0_i32, %c0_i32_0 : i32, i32, i32
  }
  func.func @transform_8(%arg0: i32, %arg1: i32) -> (i32, i32) {
    %c0_i32 = arith.constant 0 : i32
    %c0_i32_0 = arith.constant 0 : i32
    %c0_i32_1 = arith.constant 0 : i32
    return %c0_i32, %c0_i32_0 : i32, i32
  }
  func.func @transform_9(%arg0: i32, %arg1: i32) -> (i32, i32) {
    %c0_i32 = arith.constant 0 : i32
    %c0_i32_0 = arith.constant 0 : i32
    %c0_i32_1 = arith.constant 0 : i32
    return %c0_i32, %c0_i32_0 : i32, i32
  }
}

</mosaic_0001>

<llo_original>
// kernel: vgn_forward.1
$region0: #{vgn_forward.1}
  #allocation0 [shape = 'u32[]', space=smem, size = 0x4, offset = 0x4, fixed_abs, tag = 'smem constant byte address 0x4 - core index']
  #allocation1 [shape = 'u32[144,128]{1,0:T(1,128)}', space=vmem, size = 0x12000, scoped, tag = 'internal scratch']
  #allocation2 [shape = 'f32[128,128]{1,0:T(8,128)}', space=vmem, size = 0x10000, scoped, tag = 'scratch operand']
  #allocation19 [shape = 's32[]', space=sflag, size = 0x4, offset = 0, fixed_abs, tag = 'sflag constant byte address 0x0 - dummy sync flag']
  #allocation20 [shape = 's32[]', space=sflag, size = 0x4, offset = 0, fixed_abs, tag = 'sflag constant byte address 0x0 - dummy sync flag']
  #allocation21 [shape = 'u32[]', space=smem, size = 0x4, offset = 0x44, fixed_abs, tag = 'smem constant byte address 0x44 - assertion arg 0']
  #allocation22 [shape = 'u32[]', space=smem, size = 0x4, offset = 0x48, fixed_abs, tag = 'smem constant byte address 0x48 - assertion arg 1']
  %s0 = inlined_call_operand.hbm [shape: f32[3], index: 0, kind: input, shape index: {}]
  %s1 = inlined_call_operand.hbm [shape: f32[128,128], index: 1, kind: input, shape index: {}]
  %s2 = inlined_call_operand.hbm [shape: bf16[384,128], index: 2, kind: input, shape index: {}]
  %s3 = inlined_call_operand.hbm [shape: s32[384,1], index: 3, kind: input, shape index: {}]
  %s4 = inlined_call_operand.hbm [shape: s32[1,384], index: 4, kind: input, shape index: {}]
  %s5 = inlined_call_operand.hbm [shape: bf16[3,128,128], index: 5, kind: input, shape index: {}]
  %s6 = inlined_call_operand.hbm [shape: bf16[3,128,128], index: 6, kind: input, shape index: {}]
  %s7 = inlined_call_operand.hbm [shape: f32[3,8,128], index: 7, kind: input, shape index: {}]
  %s8 = inlined_call_operand.hbm [shape: f32[128,128], index: 8, kind: input, shape index: {}]
  %s9 = inlined_call_operand.hbm [shape: f32[128,128], index: 9, kind: output, shape index: {}]
  %s10 = sld [smem:[#allocation0]]
  $region114: #{vgn_forward.1} parent=0
    _
  %s12 = ssub.s32 1, %s10
  %s13 = scalar_select 0, %s12, %s10
  $region1: #{vgn_forward.1} parent=0
    #allocation3 [shape = 'u8[512]{0}', space=smem, size = 0x200, scoped, tag = 'input window, operand 0, single buffered']
    #allocation4 [shape = 's32[2]{0}', space=sflag, size = 0x8, scoped, tag = 'scoped memory for vgn_forward.1']
    #allocation5 [shape = 's32[2]{0}', space=sflag, size = 0x8, scoped, tag = 'scoped memory for vgn_forward.1']
    #allocation6 [shape = 's32[2]{0}', space=sflag, size = 0x8, scoped, tag = 'scoped memory for vgn_forward.1']
    #allocation7 [shape = 'u8[65536]{0}', space=vmem, size = 0x10000, scoped, tag = 'input window, operand 2']
    #allocation8 [shape = 'u8[131072]{0}', space=vmem, size = 0x20000, scoped, tag = 'input window, operand 3']
    #allocation9 [shape = 's32[2]{0}', space=sflag, size = 0x8, scoped, tag = 'scoped memory for vgn_forward.1']
    #allocation10 [shape = 'u8[1024]{0}', space=vmem, size = 0x400, scoped, tag = 'input window, operand 4']
    #allocation11 [shape = 'u8[65536]{0}', space=vmem, size = 0x10000, scoped, tag = 'input window, operand 5']
    #allocation12 [shape = 's32[2]{0}', space=sflag, size = 0x8, scoped, tag = 'scoped memory for vgn_forward.1']
    #allocation13 [shape = 'u8[65536]{0}', space=vmem, size = 0x10000, scoped, tag = 'input window, operand 6']
    #allocation14 [shape = 'u8[8192]{0}', space=vmem, size = 0x2000, scoped, tag = 'input window, operand 7']
    #allocation15 [shape = 's32[2]{0}', space=sflag, size = 0x8, scoped, tag = 'scoped memory for vgn_forward.1']
    #allocation16 [shape = 'u8[65536]{0}', space=vmem, size = 0x10000, scoped, tag = 'input window, operand 8, single buffered']
    #allocation17 [shape = 'u8[65536]{0}', space=vmem, size = 0x10000, scoped, tag = 'output window, operand 0, single buffered']
    %14 = vsyncpa [#allocation6], 0
    %15 = vsyncpa [#allocation4], 0
    %s16 = scalar_lea.sflag [#allocation4], 1
    %17 = vsyncpa %s16, 0
    %18 = vsyncpa [#allocation9], 0
    %s19 = scalar_lea.sflag [#allocation9], 1
    %20 = vsyncpa %s19, 0
    %21 = vsyncpa [#allocation12], 0
    %s22 = scalar_lea.sflag [#allocation12], 1
    %23 = vsyncpa %s22, 0
    %24 = vsyncpa [#allocation15], 0
    %s25 = scalar_lea.sflag [#allocation15], 1
    %26 = vsyncpa %s25, 0
    %27 = vsyncpa [#allocation5], 0
    loop: start=0, step=1, limit=11
    $region2: #{vgn_forward.1} parent=1 // loop_pre_header
      _
    $region3: #{vgn_forward.1} parent=1 // loop_header
      %s29 = sphi 0, %s33
      %p30 = scmp.ge.s32.totalorder %s29, 11
      %s36 = sphi 0, %s48
      %s37 = sphi 0, %s44
      %s38 = sphi 0, %s36
      %s39 = sphi 0, %s37
      %s40 = sphi 0, %s38
      %s41 = sphi 0, %s39
      %s49 = sphi 0, %s49
      %s51 = sphi 0, %s49
      %s52 = sphi 0, %s51
      %s66 = sphi 0, %s52
      %s72 = sphi 0, %s74
      %s75 = sphi 0, %s72
      %s76 = sphi 0, %s75
      %s92 = sphi 0, %s76
      %s98 = sphi 0, %s100
      %s101 = sphi 0, %s98
      %s102 = sphi 0, %s101
      %s118 = sphi 0, %s102
      %s124 = sphi 0, %s126
      %s127 = sphi 0, %s124
      %s128 = sphi 0, %s127
      %s144 = sphi 0, %s128
      %s150 = sphi 0, %s152
      %s153 = sphi 0, %s150
      %s154 = sphi 0, %s153
      %s170 = sphi 0, %s154
      %s176 = sphi 0, %s178
      %s179 = sphi 0, %s176
      %s180 = sphi 0, %s179
      %s196 = sphi 0, %s180
      %s202 = sphi 0, %s204
      %s205 = sphi 0, %s202
      %s206 = sphi 0, %s205
      %s222 = sphi 0, %s206
      %s226 = sphi 0, %s226
      %s228 = sphi 0, %s226
      %s229 = sphi 0, %s228
      %s243 = sphi 0, %s229
      %s247 = sphi 0, %s247
      %s249 = sphi 0, %s247
      %s250 = sphi 0, %s249
      %s264 = sphi 0, %s250
    $region4: #{vgn_forward.1} parent=1 // loop_header_branch
      %32 = sbr.rel (%p30) target = $region8
    $region5: #{vgn_forward.1} parent=1 // loop_body
      %s34 = ssub.s32 %s29, 1
      %s35 = ssub.s32 %s29, 2
      %s42 = sadd.s32 1, %s37
      %p43 = scmp.ge.s32.totalorder %s42, 3
      %s44 = scalar_select %p43, 0, %s42
      %s45 = sadd.s32 1, %s36
      %s46 = scalar_select %p43, %s45, %s36
      %p47 = scmp.ge.s32.totalorder %s46, 3
      %s48 = scalar_select %p47, 0, %s46
      %s50 = sadd.s32 %s49, 1
      %p53 = scmp.eq.s32.totalorder %s29, 8
      %p54 = scmp.ne.s32.totalorder %s49, %s51
      %p55 = scmp.eq.s32.totalorder %s29, 0
      %p56 = por %p54, %p55
      %p57 = scmp.ne.s32.totalorder %s49, %s51
      %p58 = scmp.eq.s32.totalorder %s34, 8
      %p59 = por %p57, %p58
      %p60 = scmp.ne.s32.totalorder %s51, %s52
      %p61 = scmp.eq.s32.totalorder %s34, 0
      %p62 = por %p60, %p61
      %p63 = scmp.ne.s32.totalorder %s51, %s52
      %p64 = scmp.eq.s32.totalorder %s35, 8
      %p65 = por %p63, %p64
      %p67 = scmp.ne.s32.totalorder %s52, %s66
      %p68 = scmp.eq.s32.totalorder %s35, 0
      %p69 = por %p67, %p68
      %s70 = ssub.s32 %s37, %s44
      %p71 = scmp.eq.s32.totalorder %s70, 0
      %s73 = sadd.s32 %s72, 1
      %s74 = scalar_select %p71, %s72, %s73
      %p77 = pneg %p71
      %p78 = scmp.eq.s32.totalorder %s29, 8
      %p79 = por %p77, %p78
      %p80 = scmp.ne.s32.totalorder %s72, %s75
      %p81 = scmp.eq.s32.totalorder %s29, 0
      %p82 = por %p80, %p81
      %p83 = scmp.ne.s32.totalorder %s72, %s75
      %p84 = scmp.eq.s32.totalorder %s34, 8
      %p85 = por %p83, %p84
      %p86 = scmp.ne.s32.totalorder %s75, %s76
      %p87 = scmp.eq.s32.totalorder %s34, 0
      %p88 = por %p86, %p87
      %p89 = scmp.ne.s32.totalorder %s75, %s76
      %p90 = scmp.eq.s32.totalorder %s35, 8
      %p91 = por %p89, %p90
      %p93 = scmp.ne.s32.totalorder %s76, %s92
      %p94 = scmp.eq.s32.totalorder %s35, 0
      %p95 = por %p93, %p94
      %s96 = ssub.s32 %s37, %s44
      %p97 = scmp.eq.s32.totalorder %s96, 0
      %s99 = sadd.s32 %s98, 1
      %s100 = scalar_select %p97, %s98, %s99
      %p103 = pneg %p97
      %p104 = scmp.eq.s32.totalorder %s29, 8
      %p105 = por %p103, %p104
      %p106 = scmp.ne.s32.totalorder %s98, %s101
      %p107 = scmp.eq.s32.totalorder %s29, 0
      %p108 = por %p106, %p107
      %p109 = scmp.ne.s32.totalorder %s98, %s101
      %p110 = scmp.eq.s32.totalorder %s34, 8
      %p111 = por %p109, %p110
      %p112 = scmp.ne.s32.totalorder %s101, %s102
      %p113 = scmp.eq.s32.totalorder %s34, 0
      %p114 = por %p112, %p113
      %p115 = scmp.ne.s32.totalorder %s101, %s102
      %p116 = scmp.eq.s32.totalorder %s35, 8
      %p117 = por %p115, %p116
      %p119 = scmp.ne.s32.totalorder %s102, %s118
      %p120 = scmp.eq.s32.totalorder %s35, 0
      %p121 = por %p119, %p120
      %s122 = ssub.s32 %s37, %s44
      %p123 = scmp.eq.s32.totalorder %s122, 0
      %s125 = sadd.s32 %s124, 1
      %s126 = scalar_select %p123, %s124, %s125
      %p129 = pneg %p123
      %p130 = scmp.eq.s32.totalorder %s29, 8
      %p131 = por %p129, %p130
      %p132 = scmp.ne.s32.totalorder %s124, %s127
      %p133 = scmp.eq.s32.totalorder %s29, 0
      %p134 = por %p132, %p133
      %p135 = scmp.ne.s32.totalorder %s124, %s127
      %p136 = scmp.eq.s32.totalorder %s34, 8
      %p137 = por %p135, %p136
      %p138 = scmp.ne.s32.totalorder %s127, %s128
      %p139 = scmp.eq.s32.totalorder %s34, 0
      %p140 = por %p138, %p139
      %p141 = scmp.ne.s32.totalorder %s127, %s128
      %p142 = scmp.eq.s32.totalorder %s35, 8
      %p143 = por %p141, %p142
      %p145 = scmp.ne.s32.totalorder %s128, %s144
      %p146 = scmp.eq.s32.totalorder %s35, 0
      %p147 = por %p145, %p146
      %s148 = ssub.s32 %s36, %s48
      %p149 = scmp.eq.s32.totalorder %s148, 0
      %s151 = sadd.s32 %s150, 1
      %s152 = scalar_select %p149, %s150, %s151
      %p155 = pneg %p149
      %p156 = scmp.eq.s32.totalorder %s29, 8
      %p157 = por %p155, %p156
      %p158 = scmp.ne.s32.totalorder %s150, %s153
      %p159 = scmp.eq.s32.totalorder %s29, 0
      %p160 = por %p158, %p159
      %p161 = scmp.ne.s32.totalorder %s150, %s153
      %p162 = scmp.eq.s32.totalorder %s34, 8
      %p163 = por %p161, %p162
      %p164 = scmp.ne.s32.totalorder %s153, %s154
      %p165 = scmp.eq.s32.totalorder %s34, 0
      %p166 = por %p164, %p165
      %p167 = scmp.ne.s32.totalorder %s153, %s154
      %p168 = scmp.eq.s32.totalorder %s35, 8
      %p169 = por %p167, %p168
      %p171 = scmp.ne.s32.totalorder %s154, %s170
      %p172 = scmp.eq.s32.totalorder %s35, 0
      %p173 = por %p171, %p172
      %s174 = ssub.s32 %s36, %s48
      %p175 = scmp.eq.s32.totalorder %s174, 0
      %s177 = sadd.s32 %s176, 1
      %s178 = scalar_select %p175, %s176, %s177
      %p181 = pneg %p175
      %p182 = scmp.eq.s32.totalorder %s29, 8
      %p183 = por %p181, %p182
      %p184 = scmp.ne.s32.totalorder %s176, %s179
      %p185 = scmp.eq.s32.totalorder %s29, 0
      %p186 = por %p184, %p185
      %p187 = scmp.ne.s32.totalorder %s176, %s179
      %p188 = scmp.eq.s32.totalorder %s34, 8
      %p189 = por %p187, %p188
      %p190 = scmp.ne.s32.totalorder %s179, %s180
      %p191 = scmp.eq.s32.totalorder %s34, 0
      %p192 = por %p190, %p191
      %p193 = scmp.ne.s32.totalorder %s179, %s180
      %p194 = scmp.eq.s32.totalorder %s35, 8
      %p195 = por %p193, %p194
      %p197 = scmp.ne.s32.totalorder %s180, %s196
      %p198 = scmp.eq.s32.totalorder %s35, 0
      %p199 = por %p197, %p198
      %s200 = ssub.s32 %s36, %s48
      %p201 = scmp.eq.s32.totalorder %s200, 0
      %s203 = sadd.s32 %s202, 1
      %s204 = scalar_select %p201, %s202, %s203
      %p207 = pneg %p201
      %p208 = scmp.eq.s32.totalorder %s29, 8
      %p209 = por %p207, %p208
      %p210 = scmp.ne.s32.totalorder %s202, %s205
      %p211 = scmp.eq.s32.totalorder %s29, 0
      %p212 = por %p210, %p211
      %p213 = scmp.ne.s32.totalorder %s202, %s205
      %p214 = scmp.eq.s32.totalorder %s34, 8
      %p215 = por %p213, %p214
      %p216 = scmp.ne.s32.totalorder %s205, %s206
      %p217 = scmp.eq.s32.totalorder %s34, 0
      %p218 = por %p216, %p217
      %p219 = scmp.ne.s32.totalorder %s205, %s206
      %p220 = scmp.eq.s32.totalorder %s35, 8
      %p221 = por %p219, %p220
      %p223 = scmp.ne.s32.totalorder %s206, %s222
      %p224 = scmp.eq.s32.totalorder %s35, 0
      %p225 = por %p223, %p224
      %s227 = sadd.s32 %s226, 1
      %p230 = scmp.eq.s32.totalorder %s29, 8
      %p231 = scmp.ne.s32.totalorder %s226, %s228
      %p232 = scmp.eq.s32.totalorder %s29, 0
      %p233 = por %p231, %p232
      %p234 = scmp.ne.s32.totalorder %s226, %s228
      %p235 = scmp.eq.s32.totalorder %s34, 8
      %p236 = por %p234, %p235
      %p237 = scmp.ne.s32.totalorder %s228, %s229
      %p238 = scmp.eq.s32.totalorder %s34, 0
      %p239 = por %p237, %p238
      %p240 = scmp.ne.s32.totalorder %s228, %s229
      %p241 = scmp.eq.s32.totalorder %s35, 8
      %p242 = por %p240, %p241
      %p244 = scmp.ne.s32.totalorder %s229, %s243
      %p245 = scmp.eq.s32.totalorder %s35, 0
      %p246 = por %p244, %p245
      %s248 = sadd.s32 %s247, 1
      %p251 = scmp.eq.s32.totalorder %s29, 8
      %p252 = scmp.ne.s32.totalorder %s247, %s249
      %p253 = scmp.eq.s32.totalorder %s29, 0
      %p254 = por %p252, %p253
      %p255 = scmp.ne.s32.totalorder %s247, %s249
      %p256 = scmp.eq.s32.totalorder %s34, 8
      %p257 = por %p255, %p256
      %p258 = scmp.ne.s32.totalorder %s249, %s250
      %p259 = scmp.eq.s32.totalorder %s34, 0
      %p260 = por %p258, %p259
      %p261 = scmp.ne.s32.totalorder %s249, %s250
      %p262 = scmp.eq.s32.totalorder %s35, 8
      %p263 = por %p261, %p262
      %p265 = scmp.ne.s32.totalorder %s250, %s264
      %p266 = scmp.eq.s32.totalorder %s35, 0
      %p267 = por %p265, %p266
      %p268 = scmp.le.s32.totalorder 1, %s29
      %p269 = scmp.lt.s32.totalorder %s29, 10
      %p270 = pnand %p268, %p269
      %p271 = pneg %p270
      // Predicated region
      $region9: #{vgn_forward.1} parent=5 // pred_check
        _
      $region10: #{vgn_forward.1} parent=5 // pred_check_branch
        %273 = sbr.rel (%p270) target = $region12
      $region11: #{vgn_forward.1} parent=5 // pred_region
        %s274 = ssub.s32 %s29, 1
        // Predicated region
        $region13: #{vgn_forward.1} parent=11 // pred_check
          %p275 = pneg %p62
        $region14: #{vgn_forward.1} parent=11 // pred_check_branch
          %277 = sbr.rel (%p275) target = $region16
        $region15: #{vgn_forward.1} parent=11 // pred_region
          %s279 = ssub.s32 16, 16
          %280 = vsyncadd [#allocation6], %s279
          %283 = dma.hbm_to_smem %s0, 16, [#allocation3], [#allocation6]
        $region16: #{vgn_forward.1} parent=11 // pred_fallthru
          _
        // Predicated region
        $region17: #{vgn_forward.1} parent=11 // pred_check
          %p284 = pneg %p239
        $region18: #{vgn_forward.1} parent=11 // pred_check_branch
          %286 = sbr.rel (%p284) target = $region20
        $region19: #{vgn_forward.1} parent=11 // pred_region
          %s288 = ssub.s32 2048, 2048
          %289 = vsyncadd [#allocation15], %s288
          %s290 = sshll.u32 [#allocation16], 4
          %s291 = int_to_ptr.vmem [resolvable:$true] %s290
          %296 = dma.hbm_to_vmem [thread:$0]  %s8, 2048, %s291, [#allocation15], 128, 128, 8
        $region20: #{vgn_forward.1} parent=11 // pred_fallthru
          _
      $region12: #{vgn_forward.1} parent=5 // pred_fallthru
        _
      %p297 = scmp.lt.s32.totalorder %s29, 9
      // Predicated region
      $region21: #{vgn_forward.1} parent=5 // pred_check
        %p298 = pneg %p297
      $region22: #{vgn_forward.1} parent=5 // pred_check_branch
        %300 = sbr.rel (%p298) target = $region24
      $region23: #{vgn_forward.1} parent=5 // pred_region
        // Predicated region
        $region25: #{vgn_forward.1} parent=23 // pred_check
          %p301 = pneg %p82
        $region26: #{vgn_forward.1} parent=23 // pred_check_branch
          %303 = sbr.rel (%p301) target = $region28
        $region27: #{vgn_forward.1} parent=23 // pred_region
          %s304 = sand.u32 %s72, 1
          %s305 = scalar_lea.sflag [#allocation4], %s304
          %s306 = sand.u32 %s72, 1
          %s307 = smul.addr %s306, 64
          %s308 = scalar_lea.vmem [#allocation7], %s307
          %s309 = smul.u32 16, %s37
          %s311 = ssub.s32 1024, 1024
          %312 = vsyncadd %s305, %s311
          %s313 = smul.addr %s309, 64
          %s314 = scalar_lea.hbm %s2, %s313
          %s315 = sshll.u32 %s308, 4
          %s316 = int_to_ptr.vmem [resolvable:$true] %s315
          %321 = dma.hbm_to_vmem [thread:$0]  %s314, 1024, %s316, %s305, 64, 64, 4
        $region28: #{vgn_forward.1} parent=23 // pred_fallthru
          _
        // Predicated region
        $region29: #{vgn_forward.1} parent=23 // pred_check
          %p322 = pneg %p108
        $region30: #{vgn_forward.1} parent=23 // pred_check_branch
          %324 = sbr.rel (%p322) target = $region32
        $region31: #{vgn_forward.1} parent=23 // pred_region
          %s325 = sand.u32 %s29, 1
          %s326 = scalar_lea.sflag [#allocation9], %s325
          %s327 = sand.u32 %s98, 1
          %s328 = smul.addr %s327, 128
          %s329 = scalar_lea.vmem [#allocation8], %s328
          %s330 = smul.u32 16, %s37
          %s332 = ssub.s32 2048, 2048
          %333 = vsyncadd %s326, %s332
          %s334 = smul.addr %s330, 128
          %s335 = scalar_lea.hbm %s3, %s334
          %s336 = sshll.u32 %s329, 4
          %s337 = int_to_ptr.vmem [resolvable:$true] %s336
          %342 = dma.hbm_to_vmem [thread:$0]  %s335, 2048, %s337, %s326, 128, 128, 8
        $region32: #{vgn_forward.1} parent=23 // pred_fallthru
          _
        // Predicated region
        $region33: #{vgn_forward.1} parent=23 // pred_check
          %p343 = pneg %p134
        $region34: #{vgn_forward.1} parent=23 // pred_check_branch
          %345 = sbr.rel (%p343) target = $region36
        $region35: #{vgn_forward.1} parent=23 // pred_region
          %s346 = sand.u32 %s29, 1
          %s347 = scalar_lea.sflag [#allocation9], %s346
          %s348 = sand.u32 %s124, 1
          %s349 = scalar_lea.vmem [#allocation10], %s348
          %s351 = ssub.s32 16, 16
          %352 = vsyncadd %s347, %s351
          %s353 = smul.addr %s37, 16
          %s354 = scalar_lea.hbm %s4, %s353
          %s356 = sshll.u32 %s349, 4
          %s357 = int_to_ptr.vmem [resolvable:$true] %s356
          %359 = dma.hbm_to_vmem [thread:$0]  %s354, 16, %s357, %s347
        $region36: #{vgn_forward.1} parent=23 // pred_fallthru
          _
        // Predicated region
        $region37: #{vgn_forward.1} parent=23 // pred_check
          %p360 = pneg %p160
        $region38: #{vgn_forward.1} parent=23 // pred_check_branch
          %362 = sbr.rel (%p360) target = $region40
        $region39: #{vgn_forward.1} parent=23 // pred_region
          %s363 = sand.u32 %s29, 1
          %s364 = scalar_lea.sflag [#allocation12], %s363
          %s365 = sand.u32 %s150, 1
          %s366 = smul.addr %s365, 64
          %s367 = scalar_lea.vmem [#allocation11], %s366
          %s369 = ssub.s32 1024, 1024
          %370 = vsyncadd %s364, %s369
          %s371 = smul.addr %s36, 16
          %s372 = smul.addr %s371, 64
          %s373 = scalar_lea.hbm %s5, %s372
          %s374 = sshll.u32 %s367, 4
          %s375 = int_to_ptr.vmem [resolvable:$true] %s374
          %380 = dma.hbm_to_vmem [thread:$0]  %s373, 1024, %s375, %s364, 64, 64, 4
        $region40: #{vgn_forward.1} parent=23 // pred_fallthru
          _
        // Predicated region
        $region41: #{vgn_forward.1} parent=23 // pred_check
          %p381 = pneg %p186
        $region42: #{vgn_forward.1} parent=23 // pred_check_branch
          %383 = sbr.rel (%p381) target = $region44
        $region43: #{vgn_forward.1} parent=23 // pred_region
          %s384 = sand.u32 %s29, 1
          %s385 = scalar_lea.sflag [#allocation12], %s384
          %s386 = sand.u32 %s176, 1
          %s387 = smul.addr %s386, 64
          %s388 = scalar_lea.vmem [#allocation13], %s387
          %s390 = ssub.s32 1024, 1024
          %391 = vsyncadd %s385, %s390
          %s392 = smul.addr %s36, 16
          %s393 = smul.addr %s392, 64
          %s394 = scalar_lea.hbm %s6, %s393
          %s395 = sshll.u32 %s388, 4
          %s396 = int_to_ptr.vmem [resolvable:$true] %s395
          %401 = dma.hbm_to_vmem [thread:$0]  %s394, 1024, %s396, %s385, 64, 64, 4
        $region44: #{vgn_forward.1} parent=23 // pred_fallthru
          _
        // Predicated region
        $region45: #{vgn_forward.1} parent=23 // pred_check
          %p402 = pneg %p212
        $region46: #{vgn_forward.1} parent=23 // pred_check_branch
          %404 = sbr.rel (%p402) target = $region48
        $region47: #{vgn_forward.1} parent=23 // pred_region
          %s405 = sand.u32 %s29, 1
          %s406 = scalar_lea.sflag [#allocation15], %s405
          %s407 = sand.u32 %s202, 1
          %s408 = smul.addr %s407, 8
          %s409 = scalar_lea.vmem [#allocation14], %s408
          %s411 = ssub.s32 128, 128
          %412 = vsyncadd %s406, %s411
          %s413 = smul.addr %s36, 128
          %s414 = scalar_lea.hbm %s7, %s413
          %s416 = sshll.u32 %s409, 4
          %s417 = int_to_ptr.vmem [resolvable:$true] %s416
          %419 = dma.hbm_to_vmem [thread:$0]  %s414, 128, %s417, %s406
        $region48: #{vgn_forward.1} parent=23 // pred_fallthru
          _
      $region24: #{vgn_forward.1} parent=5 // pred_fallthru
        _
      %p420 = scmp.le.s32.totalorder 1, %s29
      %p421 = scmp.lt.s32.totalorder %s29, 10
      %p422 = pnand %p420, %p421
      %p423 = pneg %p422
      // Predicated region
      $region49: #{vgn_forward.1} parent=5 // pred_check
        _
      $region50: #{vgn_forward.1} parent=5 // pred_check_branch
        %425 = sbr.rel (%p422) target = $region52
      $region51: #{vgn_forward.1} parent=5 // pred_region
        %s426 = ssub.s32 %s29, 1
        // Predicated region
        $region53: #{vgn_forward.1} parent=51 // pred_check
          %p427 = pneg %p62
        $region54: #{vgn_forward.1} parent=51 // pred_check_branch
          %429 = sbr.rel (%p427) target = $region56
        $region55: #{vgn_forward.1} parent=51 // pred_region
          %430 = dma.done [#allocation6], 16
        $region56: #{vgn_forward.1} parent=51 // pred_fallthru
          _
        %s431 = sand.u32 %s75, 1
        %s432 = scalar_lea.sflag [#allocation4], %s431
        %s433 = sand.u32 %s75, 1
        %s434 = smul.addr %s433, 64
        %s435 = scalar_lea.vmem [#allocation7], %s434
        // Predicated region
        $region57: #{vgn_forward.1} parent=51 // pred_check
          %p436 = pneg %p88
        $region58: #{vgn_forward.1} parent=51 // pred_check_branch
          %438 = sbr.rel (%p436) target = $region60
        $region59: #{vgn_forward.1} parent=51 // pred_region
          %439 = dma.done %s432, 1024
        $region60: #{vgn_forward.1} parent=51 // pred_fallthru
          _
        %s440 = sand.u32 %s34, 1
        %s441 = scalar_lea.sflag [#allocation9], %s440
        %s442 = sand.u32 %s101, 1
        %s443 = smul.addr %s442, 128
        %s444 = scalar_lea.vmem [#allocation8], %s443
        // Predicated region
        $region61: #{vgn_forward.1} parent=51 // pred_check
          %p445 = pneg %p114
        $region62: #{vgn_forward.1} parent=51 // pred_check_branch
          %447 = sbr.rel (%p445) target = $region64
        $region63: #{vgn_forward.1} parent=51 // pred_region
          %448 = dma.done %s441, 2048
        $region64: #{vgn_forward.1} parent=51 // pred_fallthru
          _
        %s449 = sand.u32 %s34, 1
        %s450 = scalar_lea.sflag [#allocation9], %s449
        %s451 = sand.u32 %s127, 1
        %s452 = scalar_lea.vmem [#allocation10], %s451
        // Predicated region
        $region65: #{vgn_forward.1} parent=51 // pred_check
          %p453 = pneg %p140
        $region66: #{vgn_forward.1} parent=51 // pred_check_branch
          %455 = sbr.rel (%p453) target = $region68
        $region67: #{vgn_forward.1} parent=51 // pred_region
          %456 = dma.done %s450, 16
        $region68: #{vgn_forward.1} parent=51 // pred_fallthru
          _
        %s457 = sand.u32 %s34, 1
        %s458 = scalar_lea.sflag [#allocation12], %s457
        %s459 = sand.u32 %s153, 1
        %s460 = smul.addr %s459, 64
        %s461 = scalar_lea.vmem [#allocation11], %s460
        // Predicated region
        $region69: #{vgn_forward.1} parent=51 // pred_check
          %p462 = pneg %p166
        $region70: #{vgn_forward.1} parent=51 // pred_check_branch
          %464 = sbr.rel (%p462) target = $region72
        $region71: #{vgn_forward.1} parent=51 // pred_region
          %465 = dma.done %s458, 1024
        $region72: #{vgn_forward.1} parent=51 // pred_fallthru
          _
        %s466 = sand.u32 %s34, 1
        %s467 = scalar_lea.sflag [#allocation12], %s466
        %s468 = sand.u32 %s179, 1
        %s469 = smul.addr %s468, 64
        %s470 = scalar_lea.vmem [#allocation13], %s469
        // Predicated region
        $region73: #{vgn_forward.1} parent=51 // pred_check
          %p471 = pneg %p192
        $region74: #{vgn_forward.1} parent=51 // pred_check_branch
          %473 = sbr.rel (%p471) target = $region76
        $region75: #{vgn_forward.1} parent=51 // pred_region
          %474 = dma.done %s467, 1024
        $region76: #{vgn_forward.1} parent=51 // pred_fallthru
          _
        %s475 = sand.u32 %s34, 1
        %s476 = scalar_lea.sflag [#allocation15], %s475
        %s477 = sand.u32 %s205, 1
        %s478 = smul.addr %s477, 8
        %s479 = scalar_lea.vmem [#allocation14], %s478
        // Predicated region
        $region77: #{vgn_forward.1} parent=51 // pred_check
          %p480 = pneg %p218
        $region78: #{vgn_forward.1} parent=51 // pred_check_branch
          %482 = sbr.rel (%p480) target = $region80
        $region79: #{vgn_forward.1} parent=51 // pred_region
          %483 = dma.done %s476, 128
        $region80: #{vgn_forward.1} parent=51 // pred_fallthru
          _
        // Predicated region
        $region81: #{vgn_forward.1} parent=51 // pred_check
          %p484 = pneg %p239
        $region82: #{vgn_forward.1} parent=51 // pred_check_branch
          %486 = sbr.rel (%p484) target = $region84
        $region83: #{vgn_forward.1} parent=51 // pred_region
          %487 = dma.done [#allocation15], 2048
        $region84: #{vgn_forward.1} parent=51 // pred_fallthru
          _
        %488 = sfence
        %p489 = pneg %p62
        %p490 = pneg %p59
        %s491 = sand.u32 %s75, 1
        %s492 = scalar_lea.sflag [#allocation4], %s491
        %s493 = sand.u32 %s75, 1
        %s494 = smul.addr %s493, 64
        %s495 = scalar_lea.vmem [#allocation7], %s494
        %p496 = pneg %p88
        %p497 = pneg %p85
        %s498 = sand.u32 %s34, 1
        %s499 = scalar_lea.sflag [#allocation9], %s498
        %s500 = sand.u32 %s101, 1
        %s501 = smul.addr %s500, 128
        %s502 = scalar_lea.vmem [#allocation8], %s501
        %p503 = pneg %p114
        %p504 = pneg %p111
        %s505 = sand.u32 %s34, 1
        %s506 = scalar_lea.sflag [#allocation9], %s505
        %s507 = sand.u32 %s127, 1
        %s508 = scalar_lea.vmem [#allocation10], %s507
        %p509 = pneg %p140
        %p510 = pneg %p137
        %s511 = sand.u32 %s34, 1
        %s512 = scalar_lea.sflag [#allocation12], %s511
        %s513 = sand.u32 %s153, 1
        %s514 = smul.addr %s513, 64
        %s515 = scalar_lea.vmem [#allocation11], %s514
        %p516 = pneg %p166
        %p517 = pneg %p163
        %s518 = sand.u32 %s34, 1
        %s519 = scalar_lea.sflag [#allocation12], %s518
        %s520 = sand.u32 %s179, 1
        %s521 = smul.addr %s520, 64
        %s522 = scalar_lea.vmem [#allocation13], %s521
        %p523 = pneg %p192
        %p524 = pneg %p189
        %s525 = sand.u32 %s34, 1
        %s526 = scalar_lea.sflag [#allocation15], %s525
        %s527 = sand.u32 %s205, 1
        %s528 = smul.addr %s527, 8
        %s529 = scalar_lea.vmem [#allocation14], %s528
        %p530 = pneg %p218
        %p531 = pneg %p215
        %p532 = pneg %p239
        %p533 = pneg %p236
        %p534 = pneg %p260
        %p535 = pneg %p257
        %s536 = smul.u32 16, %s39
        %s537 = smul.u32 16, %s39
        %p539 = scmp.eq.s32.totalorder %s38, 0
        %p540 = scmp.eq.s32.totalorder %s39, 0
        %p541 = pnand %p539, %p540
        %p542 = pneg %p541
        // Predicated region
        $region85: #{vgn_forward.1} parent=51 // pred_check
          _
        $region86: #{vgn_forward.1} parent=51 // pred_check_branch
          %544 = sbr.rel (%p541) target = $region88
        $region87: #{vgn_forward.1} parent=51 // pred_region
          $region89: #{vgn_forward.1} parent=87
            #allocation18 [shape = 's32[1]{0}', space=sflag, size = 0x4, scoped, tag = 'scoped memory for vgn_forward.1']
            // Predicated region
            $region90: #{vgn_forward.1} parent=89 // pred_check
              _
            $region91: #{vgn_forward.1} parent=89 // pred_check_branch
              %546 = sbr.rel target = $region93
            $region92: #{vgn_forward.1} parent=89 // pred_region
              %547 = sst [smem:[#allocation21]] [#allocation20]
              %548 = sst [smem:[#allocation22]] [#allocation19]
            $region93: #{vgn_forward.1} parent=89 // pred_fallthru
              _
            %550 = shalt.err (0)
            %s552 = sshll.u32 [#allocation17], 4
            %s553 = int_to_ptr.vmem [resolvable:$true] %s552
            %555 = dma.hbm_to_vmem [thread:$0]  %s1, 2048, %s553, [#allocation18]
            %s556 = smul.u32 128, 1
            %s557 = sshll.u32 %s556, 4
            %558 = dma.done [#allocation18], %s557
        $region88: #{vgn_forward.1} parent=51 // pred_fallthru
          _
        // Predicated region
        $region94: #{vgn_forward.1} parent=51 // pred_check
          %p559 = pneg %p540
        $region95: #{vgn_forward.1} parent=51 // pred_check_branch
          %561 = sbr.rel (%p559) target = $region97
        $region96: #{vgn_forward.1} parent=51 // pred_region
          %562 = vst [vmem:[#allocation2] sm:$0xff] 0.0
          %563 = vst [vmem:[#allocation2 + $0x8] sm:$0xff] 0.0
          %564 = vst [vmem:[#allocation2 + $0x10] sm:$0xff] 0.0
          %565 = vst [vmem:[#allocation2 + $0x18] sm:$0xff] 0.0
          %566 = vst [vmem:[#allocation2 + $0x20] sm:$0xff] 0.0
          %567 = vst [vmem:[#allocation2 + $0x28] sm:$0xff] 0.0
          %568 = vst [vmem:[#allocation2 + $0x30] sm:$0xff] 0.0
          %569 = vst [vmem:[#allocation2 + $0x38] sm:$0xff] 0.0
          %570 = vst [vmem:[#allocation2 + $0x40] sm:$0xff] 0.0
          %571 = vst [vmem:[#allocation2 + $0x48] sm:$0xff] 0.0
          %572 = vst [vmem:[#allocation2 + $0x50] sm:$0xff] 0.0
          %573 = vst [vmem:[#allocation2 + $0x58] sm:$0xff] 0.0
          %574 = vst [vmem:[#allocation2 + $0x60] sm:$0xff] 0.0
          %575 = vst [vmem:[#allocation2 + $0x68] sm:$0xff] 0.0
          %576 = vst [vmem:[#allocation2 + $0x70] sm:$0xff] 0.0
          %577 = vst [vmem:[#allocation2 + $0x78] sm:$0xff] 0.0
        $region97: #{vgn_forward.1} parent=51 // pred_fallthru
          _
        %v578 = vld [vmem:[#allocation17] sm:$0xff]
        %v579 = vld [vmem:[#allocation17 + $0x8] sm:$0xff]
        %v580 = vld [vmem:[#allocation17 + $0x10] sm:$0xff]
        %v581 = vld [vmem:[#allocation17 + $0x18] sm:$0xff]
        %v582 = vld [vmem:[#allocation17 + $0x20] sm:$0xff]
        %v583 = vld [vmem:[#allocation17 + $0x28] sm:$0xff]
        %v584 = vld [vmem:[#allocation17 + $0x30] sm:$0xff]
        %v585 = vld [vmem:[#allocation17 + $0x38] sm:$0xff]
        %v586 = vld [vmem:[#allocation17 + $0x40] sm:$0xff]
        %v587 = vld [vmem:[#allocation17 + $0x48] sm:$0xff]
        %v588 = vld [vmem:[#allocation17 + $0x50] sm:$0xff]
        %v589 = vld [vmem:[#allocation17 + $0x58] sm:$0xff]
        %v590 = vld [vmem:[#allocation17 + $0x60] sm:$0xff]
        %v591 = vld [vmem:[#allocation17 + $0x68] sm:$0xff]
        %v592 = vld [vmem:[#allocation17 + $0x70] sm:$0xff]
        %v593 = vld [vmem:[#allocation17 + $0x78] sm:$0xff]
        %v594 = vld [vmem:[%s444] sm:$0xff]
        %v595 = vld [vmem:[%s444 + $0x8] sm:$0xff]
        %v596 = vld [vmem:[%s444 + $0x10] sm:$0xff]
        %v597 = vld [vmem:[%s444 + $0x18] sm:$0xff]
        %v598 = vld [vmem:[%s444 + $0x20] sm:$0xff]
        %v599 = vld [vmem:[%s444 + $0x28] sm:$0xff]
        %v600 = vld [vmem:[%s444 + $0x30] sm:$0xff]
        %v601 = vld [vmem:[%s444 + $0x38] sm:$0xff]
        %v602 = vld [vmem:[%s444 + $0x40] sm:$0xff]
        %v603 = vld [vmem:[%s444 + $0x48] sm:$0xff]
        %v604 = vld [vmem:[%s444 + $0x50] sm:$0xff]
        %v605 = vld [vmem:[%s444 + $0x58] sm:$0xff]
        %v606 = vld [vmem:[%s444 + $0x60] sm:$0xff]
        %v607 = vld [vmem:[%s444 + $0x68] sm:$0xff]
        %v608 = vld [vmem:[%s444 + $0x70] sm:$0xff]
        %v609 = vld [vmem:[%s444 + $0x78] sm:$0xff]
        %v610 = vlaneseq
        %v611 = vand.u32 %v610, 127
        %612 = vset.pattern.permute.xlu0 0
        %613 = vperm.xlu0 %612, %v594
        %v614 = vpop.permute.xlu0 %613
        %615 = vset.pattern.permute.xlu0 0
        %616 = vperm.xlu0 %615, %v595
        %v617 = vpop.permute.xlu0 %616
        %618 = vset.pattern.permute.xlu0 0
        %619 = vperm.xlu0 %618, %v596
        %v620 = vpop.permute.xlu0 %619
        %621 = vset.pattern.permute.xlu0 0
        %622 = vperm.xlu0 %621, %v597
        %v623 = vpop.permute.xlu0 %622
        %624 = vset.pattern.permute.xlu0 0
        %625 = vperm.xlu0 %624, %v598
        %v626 = vpop.permute.xlu0 %625
        %627 = vset.pattern.permute.xlu0 0
        %628 = vperm.xlu0 %627, %v599
        %v629 = vpop.permute.xlu0 %628
        %630 = vset.pattern.permute.xlu0 0
        %631 = vperm.xlu0 %630, %v600
        %v632 = vpop.permute.xlu0 %631
        %633 = vset.pattern.permute.xlu0 0
        %634 = vperm.xlu0 %633, %v601
        %v635 = vpop.permute.xlu0 %634
        %636 = vset.pattern.permute.xlu0 0
        %637 = vperm.xlu0 %636, %v602
        %v638 = vpop.permute.xlu0 %637
        %639 = vset.pattern.permute.xlu0 0
        %640 = vperm.xlu0 %639, %v603
        %v641 = vpop.permute.xlu0 %640
        %642 = vset.pattern.permute.xlu0 0
        %643 = vperm.xlu0 %642, %v604
        %v644 = vpop.permute.xlu0 %643
        %645 = vset.pattern.permute.xlu0 0
        %646 = vperm.xlu0 %645, %v605
        %v647 = vpop.permute.xlu0 %646
        %648 = vset.pattern.permute.xlu0 0
        %649 = vperm.xlu0 %648, %v606
        %v650 = vpop.permute.xlu0 %649
        %651 = vset.pattern.permute.xlu0 0
        %652 = vperm.xlu0 %651, %v607
        %v653 = vpop.permute.xlu0 %652
        %654 = vset.pattern.permute.xlu0 0
        %655 = vperm.xlu0 %654, %v608
        %v656 = vpop.permute.xlu0 %655
        %657 = vset.pattern.permute.xlu0 0
        %658 = vperm.xlu0 %657, %v609
        %v659 = vpop.permute.xlu0 %658
        %vm660 = vcmp.eq.s32.totalorder %v611, %v614
        %vm661 = vcmp.eq.s32.totalorder %v611, %v617
        %vm662 = vcmp.eq.s32.totalorder %v611, %v620
        %vm663 = vcmp.eq.s32.totalorder %v611, %v623
        %vm664 = vcmp.eq.s32.totalorder %v611, %v626
        %vm665 = vcmp.eq.s32.totalorder %v611, %v629
        %vm666 = vcmp.eq.s32.totalorder %v611, %v632
        %vm667 = vcmp.eq.s32.totalorder %v611, %v635
        %vm668 = vcmp.eq.s32.totalorder %v611, %v638
        %vm669 = vcmp.eq.s32.totalorder %v611, %v641
        %vm670 = vcmp.eq.s32.totalorder %v611, %v644
        %vm671 = vcmp.eq.s32.totalorder %v611, %v647
        %vm672 = vcmp.eq.s32.totalorder %v611, %v650
        %vm673 = vcmp.eq.s32.totalorder %v611, %v653
        %vm674 = vcmp.eq.s32.totalorder %v611, %v656
        %vm675 = vcmp.eq.s32.totalorder %v611, %v659
        %v676 = vsel %vm660, 1.0, 0.0
        %v677 = vsel %vm661, 1.0, 0.0
        %v678 = vsel %vm662, 1.0, 0.0
        %v679 = vsel %vm663, 1.0, 0.0
        %v680 = vsel %vm664, 1.0, 0.0
        %v681 = vsel %vm665, 1.0, 0.0
        %v682 = vsel %vm666, 1.0, 0.0
        %v683 = vsel %vm667, 1.0, 0.0
        %v684 = vsel %vm668, 1.0, 0.0
        %v685 = vsel %vm669, 1.0, 0.0
        %v686 = vsel %vm670, 1.0, 0.0
        %v687 = vsel %vm671, 1.0, 0.0
        %v688 = vsel %vm672, 1.0, 0.0
        %v689 = vsel %vm673, 1.0, 0.0
        %v690 = vsel %vm674, 1.0, 0.0
        %v691 = vsel %vm675, 1.0, 0.0
        %v692 = vpack.c.bf16 %v677, %v676
        %v693 = vpack.c.bf16 %v679, %v678
        %v694 = vpack.c.bf16 %v681, %v680
        %v695 = vpack.c.bf16 %v683, %v682
        %v696 = vpack.c.bf16 %v685, %v684
        %v697 = vpack.c.bf16 %v687, %v686
        %v698 = vpack.c.bf16 %v689, %v688
        %v699 = vpack.c.bf16 %v691, %v690
        %v700 = vpack.c.bf16 %v579, %v578
        %v701 = vpack.c.bf16 %v581, %v580
        %v702 = vpack.c.bf16 %v583, %v582
        %v703 = vpack.c.bf16 %v585, %v584
        %v704 = vpack.c.bf16 %v587, %v586
        %v705 = vpack.c.bf16 %v589, %v588
        %v706 = vpack.c.bf16 %v591, %v590
        %v707 = vpack.c.bf16 %v593, %v592
        %708 = vmatprep.subr.bf16.mxu0 0
        %709 = vmatpush1.bf16.msra.mxu0 %v700
        %710 = vmatprep.subr.bf16.mxu0 0
        %711 = vmatpush1.bf16.msra.mxu0 %v701
        %712 = vmatprep.subr.bf16.mxu0 0
        %713 = vmatpush1.bf16.msra.mxu0 %v702
        %714 = vmatprep.subr.bf16.mxu0 0
        %715 = vmatpush1.bf16.msra.mxu0 %v703
        %716 = vmatprep.subr.bf16.mxu0 0
        %717 = vmatpush1.bf16.msra.mxu0 %v704
        %718 = vmatprep.subr.bf16.mxu0 0
        %719 = vmatpush1.bf16.msra.mxu0 %v705
        %720 = vmatprep.subr.bf16.mxu0 0
        %721 = vmatpush1.bf16.msra.mxu0 %v706
        %722 = vmatprep.subr.bf16.mxu0 0
        %723 = vmatpush1.bf16.msra.mxu0 %v707
        %724 = vmatprep.subr.bf16.mxu0 0
        %725 = vmatpush1.bf16.msra.mxu0 0
        %726 = vmatprep.subr.bf16.mxu0 0
        %727 = vmatpush1.bf16.msra.mxu0 0
        %728 = vmatprep.subr.bf16.mxu0 0
        %729 = vmatpush1.bf16.msra.mxu0 0
        %730 = vmatprep.subr.bf16.mxu0 0
        %731 = vmatpush1.bf16.msra.mxu0 0
        %732 = vmatprep.subr.bf16.mxu0 0
        %733 = vmatpush1.bf16.msra.mxu0 0
        %734 = vmatprep.subr.bf16.mxu0 0
        %735 = vmatpush1.bf16.msra.mxu0 0
        %736 = vmatprep.subr.bf16.mxu0 0
        %737 = vmatpush1.bf16.msra.mxu0 0
        %738 = vmatprep.subr.bf16.mxu0 0
        %739 = vmatpush1.bf16.msra.mxu0 0
        %740 = vmatprep.mubr.bf16.mxu0 0
        %741 = vmatmul.mubr.bf16.gmra.mrb[0].mxu0 %v692
        %v742 = vpop.f32.mrb[0].mxu0
        %v743 = vadd.f32 0.0, %v742
        %v744 = vpop.f32.mrb[0].mxu0
        %v745 = vpop.f32.mrb[0].mxu0
        %v746 = vadd.f32 0.0, %v745
        %v747 = vpop.f32.mrb[0].mxu0
        %748 = vmatprep.mubr.bf16.mxu0 0
        %749 = vmatmul.mubr.bf16.gmra.mrb[0].mxu0 %v693
        %v750 = vpop.f32.mrb[0].mxu0
        %v751 = vadd.f32 0.0, %v750
        %v752 = vpop.f32.mrb[0].mxu0
        %v753 = vpop.f32.mrb[0].mxu0
        %v754 = vadd.f32 0.0, %v753
        %v755 = vpop.f32.mrb[0].mxu0
        %756 = vmatprep.mubr.bf16.mxu0 0
        %757 = vmatmul.mubr.bf16.gmra.mrb[0].mxu0 %v694
        %v758 = vpop.f32.mrb[0].mxu0
        %v759 = vadd.f32 0.0, %v758
        %v760 = vpop.f32.mrb[0].mxu0
        %v761 = vpop.f32.mrb[0].mxu0
        %v762 = vadd.f32 0.0, %v761
        %v763 = vpop.f32.mrb[0].mxu0
        %764 = vmatprep.mubr.bf16.mxu0 0
        %765 = vmatmul.mubr.bf16.gmra.mrb[0].mxu0 %v695
        %v766 = vpop.f32.mrb[0].mxu0
        %v767 = vadd.f32 0.0, %v766
        %v768 = vpop.f32.mrb[0].mxu0
        %v769 = vpop.f32.mrb[0].mxu0
        %v770 = vadd.f32 0.0, %v769
        %v771 = vpop.f32.mrb[0].mxu0
        %772 = vmatprep.mubr.bf16.mxu0 0
        %773 = vmatmul.mubr.bf16.gmra.mrb[0].mxu0 %v696
        %v774 = vpop.f32.mrb[0].mxu0
        %v775 = vadd.f32 0.0, %v774
        %v776 = vpop.f32.mrb[0].mxu0
        %v777 = vpop.f32.mrb[0].mxu0
        %v778 = vadd.f32 0.0, %v777
        %v779 = vpop.f32.mrb[0].mxu0
        %780 = vmatprep.mubr.bf16.mxu0 0
        %781 = vmatmul.mubr.bf16.gmra.mrb[0].mxu0 %v697
        %v782 = vpop.f32.mrb[0].mxu0
        %v783 = vadd.f32 0.0, %v782
        %v784 = vpop.f32.mrb[0].mxu0
        %v785 = vpop.f32.mrb[0].mxu0
        %v786 = vadd.f32 0.0, %v785
        %v787 = vpop.f32.mrb[0].mxu0
        %788 = vmatprep.mubr.bf16.mxu0 0
        %789 = vmatmul.mubr.bf16.gmra.mrb[0].mxu0 %v698
        %v790 = vpop.f32.mrb[0].mxu0
        %v791 = vadd.f32 0.0, %v790
        %v792 = vpop.f32.mrb[0].mxu0
        %v793 = vpop.f32.mrb[0].mxu0
        %v794 = vadd.f32 0.0, %v793
        %v795 = vpop.f32.mrb[0].mxu0
        %796 = vmatprep.mubr.bf16.mxu0 0
        %797 = vmatmul.mubr.bf16.gmra.mrb[0].mxu0 %v699
        %v798 = vpop.f32.mrb[0].mxu0
        %v799 = vadd.f32 0.0, %v798
        %v800 = vpop.f32.mrb[0].mxu0
        %v801 = vpop.f32.mrb[0].mxu0
        %v802 = vadd.f32 0.0, %v801
        %v803 = vpop.f32.mrb[0].mxu0
        %804 = vdwg.mxu0
        %v805 = vpack.c.bf16 %v746, %v743
        %v806 = vpack.c.bf16 %v754, %v751
        %v807 = vpack.c.bf16 %v762, %v759
        %v808 = vpack.c.bf16 %v770, %v767
        %v809 = vpack.c.bf16 %v778, %v775
        %v810 = vpack.c.bf16 %v786, %v783
        %v811 = vpack.c.bf16 %v794, %v791
        %v812 = vpack.c.bf16 %v802, %v799
        %v813 = vld [vmem:[%s435] sm:$0xf]
        %v814 = vld [vmem:[%s435 + $0x4] sm:$0xf]
        %v815 = vld [vmem:[%s435 + $0x8] sm:$0xf]
        %v816 = vld [vmem:[%s435 + $0xc] sm:$0xf]
        %v817 = vld [vmem:[%s435 + $0x10] sm:$0xf]
        %v818 = vld [vmem:[%s435 + $0x14] sm:$0xf]
        %v819 = vld [vmem:[%s435 + $0x18] sm:$0xf]
        %v820 = vld [vmem:[%s435 + $0x1c] sm:$0xf]
        %v821 = vld [vmem:[%s435 + $0x20] sm:$0xf]
        %v822 = vld [vmem:[%s435 + $0x24] sm:$0xf]
        %v823 = vld [vmem:[%s435 + $0x28] sm:$0xf]
        %v824 = vld [vmem:[%s435 + $0x2c] sm:$0xf]
        %v825 = vld [vmem:[%s435 + $0x30] sm:$0xf]
        %v826 = vld [vmem:[%s435 + $0x34] sm:$0xf]
        %v827 = vld [vmem:[%s435 + $0x38] sm:$0xf]
        %v828 = vld [vmem:[%s435 + $0x3c] sm:$0xf]
        %v845 = vunpack.c.l.b16 %v813
        %v846 = vunpack.c.l.b16 %v814
        %v847 = vunpack.c.l.b16 %v815
        %v848 = vunpack.c.l.b16 %v816
        %v849 = vunpack.c.l.b16 %v817
        %v850 = vunpack.c.l.b16 %v818
        %v851 = vunpack.c.l.b16 %v819
        %v852 = vunpack.c.l.b16 %v820
        %v853 = vunpack.c.l.b16 %v821
        %v854 = vunpack.c.l.b16 %v822
        %v855 = vunpack.c.l.b16 %v823
        %v856 = vunpack.c.l.b16 %v824
        %v857 = vunpack.c.l.b16 %v825
        %v858 = vunpack.c.l.b16 %v826
        %v859 = vunpack.c.l.b16 %v827
        %v860 = vunpack.c.l.b16 %v828
        %v861 = vpack.c.b16 %v846, %v845
        %v862 = vpack.c.b16 %v848, %v847
        %v863 = vpack.c.b16 %v850, %v849
        %v864 = vpack.c.b16 %v852, %v851
        %v865 = vpack.c.b16 %v854, %v853
        %v866 = vpack.c.b16 %v856, %v855
        %v867 = vpack.c.b16 %v858, %v857
        %v868 = vpack.c.b16 %v860, %v859
        %v877 = vadd.bf16 %v805, %v861
        %v878 = vadd.bf16 %v806, %v862
        %v879 = vadd.bf16 %v807, %v863
        %v880 = vadd.bf16 %v808, %v864
        %v881 = vadd.bf16 %v809, %v865
        %v882 = vadd.bf16 %v810, %v866
        %v883 = vadd.bf16 %v811, %v867
        %v884 = vadd.bf16 %v812, %v868
        %v885 = vmax.bf16 %v877, 0
        %v886 = vmax.bf16 %v878, 0
        %v887 = vmax.bf16 %v879, 0
        %v888 = vmax.bf16 %v880, 0
        %v889 = vmax.bf16 %v881, 0
        %v890 = vmax.bf16 %v882, 0
        %v891 = vmax.bf16 %v883, 0
        %v892 = vmax.bf16 %v884, 0
        %v893 = vld [vmem:[%s452] sm:$0x1]
        %v894 = vlaneseq
        %v895 = vshrl.u32 %v894, 7
        %v896 = vadd.s32 %v895, 8
        %v897 = vadd.s32 %v895, 16
        %v898 = vadd.s32 %v895, 24
        %v899 = vadd.s32 %v895, 32
        %v900 = vadd.s32 %v895, 40
        %v901 = vadd.s32 %v895, 48
        %v902 = vadd.s32 %v895, 56
        %v903 = vadd.s32 %v895, 64
        %v904 = vadd.s32 %v895, 72
        %v905 = vadd.s32 %v895, 80
        %v906 = vadd.s32 %v895, 88
        %v907 = vadd.s32 %v895, 96
        %v908 = vadd.s32 %v895, 104
        %v909 = vadd.s32 %v895, 112
        %v910 = vadd.s32 %v895, 120
        %v911 = vlaneseq
        %v912 = vshrl.u32 %v911, 7
        %v913 = vsub.s32 0, %v912
        %v914 = vrot.slane %v893, %v913
        %vm915 = vcmp.eq.s32.totalorder %v895, %v914
        %vm916 = vcmp.eq.s32.totalorder %v896, %v914
        %vm917 = vcmp.eq.s32.totalorder %v897, %v914
        %vm918 = vcmp.eq.s32.totalorder %v898, %v914
        %vm919 = vcmp.eq.s32.totalorder %v899, %v914
        %vm920 = vcmp.eq.s32.totalorder %v900, %v914
        %vm921 = vcmp.eq.s32.totalorder %v901, %v914
        %vm922 = vcmp.eq.s32.totalorder %v902, %v914
        %vm923 = vcmp.eq.s32.totalorder %v903, %v914
        %vm924 = vcmp.eq.s32.totalorder %v904, %v914
        %vm925 = vcmp.eq.s32.totalorder %v905, %v914
        %vm926 = vcmp.eq.s32.totalorder %v906, %v914
        %vm927 = vcmp.eq.s32.totalorder %v907, %v914
        %vm928 = vcmp.eq.s32.totalorder %v908, %v914
        %vm929 = vcmp.eq.s32.totalorder %v909, %v914
        %vm930 = vcmp.eq.s32.totalorder %v910, %v914
        %v931 = vsel %vm915, 1.0, 0.0
        %v932 = vsel %vm916, 1.0, 0.0
        %v933 = vsel %vm917, 1.0, 0.0
        %v934 = vsel %vm918, 1.0, 0.0
        %v935 = vsel %vm919, 1.0, 0.0
        %v936 = vsel %vm920, 1.0, 0.0
        %v937 = vsel %vm921, 1.0, 0.0
        %v938 = vsel %vm922, 1.0, 0.0
        %v939 = vsel %vm923, 1.0, 0.0
        %v940 = vsel %vm924, 1.0, 0.0
        %v941 = vsel %vm925, 1.0, 0.0
        %v942 = vsel %vm926, 1.0, 0.0
        %v943 = vsel %vm927, 1.0, 0.0
        %v944 = vsel %vm928, 1.0, 0.0
        %v945 = vsel %vm929, 1.0, 0.0
        %v946 = vsel %vm930, 1.0, 0.0
        %v947 = vpack.c.bf16 %v932, %v931
        %v948 = vpack.c.bf16 %v934, %v933
        %v949 = vpack.c.bf16 %v936, %v935
        %v950 = vpack.c.bf16 %v938, %v937
        %v951 = vpack.c.bf16 %v940, %v939
        %v952 = vpack.c.bf16 %v942, %v941
        %v953 = vpack.c.bf16 %v944, %v943
        %v954 = vpack.c.bf16 %v946, %v945
        %v955 = vld [vmem:[#allocation2] sm:$0xff]
        %v956 = vld [vmem:[#allocation2 + $0x8] sm:$0xff]
        %v957 = vld [vmem:[#allocation2 + $0x10] sm:$0xff]
        %v958 = vld [vmem:[#allocation2 + $0x18] sm:$0xff]
        %v959 = vld [vmem:[#allocation2 + $0x20] sm:$0xff]
        %v960 = vld [vmem:[#allocation2 + $0x28] sm:$0xff]
        %v961 = vld [vmem:[#allocation2 + $0x30] sm:$0xff]
        %v962 = vld [vmem:[#allocation2 + $0x38] sm:$0xff]
        %v963 = vld [vmem:[#allocation2 + $0x40] sm:$0xff]
        %v964 = vld [vmem:[#allocation2 + $0x48] sm:$0xff]
        %v965 = vld [vmem:[#allocation2 + $0x50] sm:$0xff]
        %v966 = vld [vmem:[#allocation2 + $0x58] sm:$0xff]
        %v967 = vld [vmem:[#allocation2 + $0x60] sm:$0xff]
        %v968 = vld [vmem:[#allocation2 + $0x68] sm:$0xff]
        %v969 = vld [vmem:[#allocation2 + $0x70] sm:$0xff]
        %v970 = vld [vmem:[#allocation2 + $0x78] sm:$0xff]
        %971 = vmatprep.subr.bf16.mxu0 0
        %972 = vmatpush1.bf16.msra.mxu0 %v885
        %973 = vmatprep.subr.bf16.mxu0 0
        %974 = vmatpush1.bf16.msra.mxu0 %v886
        %975 = vmatprep.subr.bf16.mxu0 0
        %976 = vmatpush1.bf16.msra.mxu0 %v887
        %977 = vmatprep.subr.bf16.mxu0 0
        %978 = vmatpush1.bf16.msra.mxu0 %v888
        %979 = vmatprep.subr.bf16.mxu0 0
        %980 = vmatpush1.bf16.msra.mxu0 %v889
        %981 = vmatprep.subr.bf16.mxu0 0
        %982 = vmatpush1.bf16.msra.mxu0 %v890
        %983 = vmatprep.subr.bf16.mxu0 0
        %984 = vmatpush1.bf16.msra.mxu0 %v891
        %985 = vmatprep.subr.bf16.mxu0 0
        %986 = vmatpush1.bf16.msra.mxu0 %v892
        %987 = vmatprep.subr.bf16.mxu0 0
        %988 = vmatpush1.bf16.msra.mxu0 0
        %989 = vmatprep.subr.bf16.mxu0 0
        %990 = vmatpush1.bf16.msra.mxu0 0
        %991 = vmatprep.subr.bf16.mxu0 0
        %992 = vmatpush1.bf16.msra.mxu0 0
        %993 = vmatprep.subr.bf16.mxu0 0
        %994 = vmatpush1.bf16.msra.mxu0 0
        %995 = vmatprep.subr.bf16.mxu0 0
        %996 = vmatpush1.bf16.msra.mxu0 0
        %997 = vmatprep.subr.bf16.mxu0 0
        %998 = vmatpush1.bf16.msra.mxu0 0
        %999 = vmatprep.subr.bf16.mxu0 0
        %1000 = vmatpush1.bf16.msra.mxu0 0
        %1001 = vmatprep.subr.bf16.mxu0 0
        %1002 = vmatpush1.bf16.msra.mxu0 0
        %1003 = vmatprep.mubr.bf16.mxu0 0
        %1004 = vmatmul.mubr.bf16.gmra.mrb[0].mxu0 %v947
        %v1005 = vpop.f32.mrb[0].mxu0
        %v1006 = vadd.f32 0.0, %v1005
        %v1007 = vpop.f32.mrb[0].mxu0
        %v1008 = vpop.f32.mrb[0].mxu0
        %v1009 = vadd.f32 0.0, %v1008
        %v1010 = vpop.f32.mrb[0].mxu0
        %1011 = vmatprep.mubr.bf16.mxu0 0
        %1012 = vmatmul.mubr.bf16.gmra.mrb[0].mxu0 %v948
        %v1013 = vpop.f32.mrb[0].mxu0
        %v1014 = vadd.f32 0.0, %v1013
        %v1015 = vpop.f32.mrb[0].mxu0
        %v1016 = vpop.f32.mrb[0].mxu0
        %v1017 = vadd.f32 0.0, %v1016
        %v1018 = vpop.f32.mrb[0].mxu0
        %1019 = vmatprep.mubr.bf16.mxu0 0
        %1020 = vmatmul.mubr.bf16.gmra.mrb[0].mxu0 %v949
        %v1021 = vpop.f32.mrb[0].mxu0
        %v1022 = vadd.f32 0.0, %v1021
        %v1023 = vpop.f32.mrb[0].mxu0
        %v1024 = vpop.f32.mrb[0].mxu0
        %v1025 = vadd.f32 0.0, %v1024
        %v1026 = vpop.f32.mrb[0].mxu0
        %1027 = vmatprep.mubr.bf16.mxu0 0
        %1028 = vmatmul.mubr.bf16.gmra.mrb[0].mxu0 %v950
        %v1029 = vpop.f32.mrb[0].mxu0
        %v1030 = vadd.f32 0.0, %v1029
        %v1031 = vpop.f32.mrb[0].mxu0
        %v1032 = vpop.f32.mrb[0].mxu0
        %v1033 = vadd.f32 0.0, %v1032
        %v1034 = vpop.f32.mrb[0].mxu0
        %1035 = vmatprep.mubr.bf16.mxu0 0
        %1036 = vmatmul.mubr.bf16.gmra.mrb[0].mxu0 %v951
        %v1037 = vpop.f32.mrb[0].mxu0
        %v1038 = vadd.f32 0.0, %v1037
        %v1039 = vpop.f32.mrb[0].mxu0
        %v1040 = vpop.f32.mrb[0].mxu0
        %v1041 = vadd.f32 0.0, %v1040
        %v1042 = vpop.f32.mrb[0].mxu0
        %1043 = vmatprep.mubr.bf16.mxu0 0
        %1044 = vmatmul.mubr.bf16.gmra.mrb[0].mxu0 %v952
        %v1045 = vpop.f32.mrb[0].mxu0
        %v1046 = vadd.f32 0.0, %v1045
        %v1047 = vpop.f32.mrb[0].mxu0
        %v1048 = vpop.f32.mrb[0].mxu0
        %v1049 = vadd.f32 0.0, %v1048
        %v1050 = vpop.f32.mrb[0].mxu0
        %1051 = vmatprep.mubr.bf16.mxu0 0
        %1052 = vmatmul.mubr.bf16.gmra.mrb[0].mxu0 %v953
        %v1053 = vpop.f32.mrb[0].mxu0
        %v1054 = vadd.f32 0.0, %v1053
        %v1055 = vpop.f32.mrb[0].mxu0
        %v1056 = vpop.f32.mrb[0].mxu0
        %v1057 = vadd.f32 0.0, %v1056
        %v1058 = vpop.f32.mrb[0].mxu0
        %1059 = vmatprep.mubr.bf16.mxu0 0
        %1060 = vmatmul.mubr.bf16.gmra.mrb[0].mxu0 %v954
        %v1061 = vpop.f32.mrb[0].mxu0
        %v1062 = vadd.f32 0.0, %v1061
        %v1063 = vpop.f32.mrb[0].mxu0
        %v1064 = vpop.f32.mrb[0].mxu0
        %v1065 = vadd.f32 0.0, %v1064
        %v1066 = vpop.f32.mrb[0].mxu0
        %1067 = vdwg.mxu0
        %v1068 = vadd.f32 %v955, %v1006
        %v1069 = vadd.f32 %v956, %v1009
        %v1070 = vadd.f32 %v957, %v1014
        %v1071 = vadd.f32 %v958, %v1017
        %v1072 = vadd.f32 %v959, %v1022
        %v1073 = vadd.f32 %v960, %v1025
        %v1074 = vadd.f32 %v961, %v1030
        %v1075 = vadd.f32 %v962, %v1033
        %v1076 = vadd.f32 %v963, %v1038
        %v1077 = vadd.f32 %v964, %v1041
        %v1078 = vadd.f32 %v965, %v1046
        %v1079 = vadd.f32 %v966, %v1049
        %v1080 = vadd.f32 %v967, %v1054
        %v1081 = vadd.f32 %v968, %v1057
        %v1082 = vadd.f32 %v969, %v1062
        %v1083 = vadd.f32 %v970, %v1065
        %1084 = vst [vmem:[#allocation2] sm:$0xff] %v1068
        %1085 = vst [vmem:[#allocation2 + $0x8] sm:$0xff] %v1069
        %1086 = vst [vmem:[#allocation2 + $0x10] sm:$0xff] %v1070
        %1087 = vst [vmem:[#allocation2 + $0x18] sm:$0xff] %v1071
        %1088 = vst [vmem:[#allocation2 + $0x20] sm:$0xff] %v1072
        %1089 = vst [vmem:[#allocation2 + $0x28] sm:$0xff] %v1073
        %1090 = vst [vmem:[#allocation2 + $0x30] sm:$0xff] %v1074
        %1091 = vst [vmem:[#allocation2 + $0x38] sm:$0xff] %v1075
        %1092 = vst [vmem:[#allocation2 + $0x40] sm:$0xff] %v1076
        %1093 = vst [vmem:[#allocation2 + $0x48] sm:$0xff] %v1077
        %1094 = vst [vmem:[#allocation2 + $0x50] sm:$0xff] %v1078
        %1095 = vst [vmem:[#allocation2 + $0x58] sm:$0xff] %v1079
        %1096 = vst [vmem:[#allocation2 + $0x60] sm:$0xff] %v1080
        %1097 = vst [vmem:[#allocation2 + $0x68] sm:$0xff] %v1081
        %1098 = vst [vmem:[#allocation2 + $0x70] sm:$0xff] %v1082
        %1099 = vst [vmem:[#allocation2 + $0x78] sm:$0xff] %v1083
        %p1100 = scmp.eq.s32.totalorder %s39, 2
        // Predicated region
        $region98: #{vgn_forward.1} parent=51 // pred_check
          %p1101 = pneg %p1100
        $region99: #{vgn_forward.1} parent=51 // pred_check_branch
          %1103 = sbr.rel (%p1101) target = $region101
        $region100: #{vgn_forward.1} parent=51 // pred_region
          %s1104 = sld [smem:[#allocation3 + %s38]]
          %s1105 = sadd.f32 %s1104, 1.0
          %v1106 = vstv %s1105
          %v1107 = vmul.f32 %v1106, %v578
          %v1108 = vmul.f32 %v1106, %v579
          %v1109 = vmul.f32 %v1106, %v580
          %v1110 = vmul.f32 %v1106, %v581
          %v1111 = vmul.f32 %v1106, %v582
          %v1112 = vmul.f32 %v1106, %v583
          %v1113 = vmul.f32 %v1106, %v584
          %v1114 = vmul.f32 %v1106, %v585
          %v1115 = vmul.f32 %v1106, %v586
          %v1116 = vmul.f32 %v1106, %v587
          %v1117 = vmul.f32 %v1106, %v588
          %v1118 = vmul.f32 %v1106, %v589
          %v1119 = vmul.f32 %v1106, %v590
          %v1120 = vmul.f32 %v1106, %v591
          %v1121 = vmul.f32 %v1106, %v592
          %v1122 = vmul.f32 %v1106, %v593
          %v1123 = vld [vmem:[#allocation2] sm:$0xff]
          %v1124 = vld [vmem:[#allocation2 + $0x8] sm:$0xff]
          %v1125 = vld [vmem:[#allocation2 + $0x10] sm:$0xff]
          %v1126 = vld [vmem:[#allocation2 + $0x18] sm:$0xff]
          %v1127 = vld [vmem:[#allocation2 + $0x20] sm:$0xff]
          %v1128 = vld [vmem:[#allocation2 + $0x28] sm:$0xff]
          %v1129 = vld [vmem:[#allocation2 + $0x30] sm:$0xff]
          %v1130 = vld [vmem:[#allocation2 + $0x38] sm:$0xff]
          %v1131 = vld [vmem:[#allocation2 + $0x40] sm:$0xff]
          %v1132 = vld [vmem:[#allocation2 + $0x48] sm:$0xff]
          %v1133 = vld [vmem:[#allocation2 + $0x50] sm:$0xff]
          %v1134 = vld [vmem:[#allocation2 + $0x58] sm:$0xff]
          %v1135 = vld [vmem:[#allocation2 + $0x60] sm:$0xff]
          %v1136 = vld [vmem:[#allocation2 + $0x68] sm:$0xff]
          %v1137 = vld [vmem:[#allocation2 + $0x70] sm:$0xff]
          %v1138 = vld [vmem:[#allocation2 + $0x78] sm:$0xff]
          %v1139 = vadd.f32 %v1107, %v1123
          %v1140 = vadd.f32 %v1108, %v1124
          %v1141 = vadd.f32 %v1109, %v1125
          %v1142 = vadd.f32 %v1110, %v1126
          %v1143 = vadd.f32 %v1111, %v1127
          %v1144 = vadd.f32 %v1112, %v1128
          %v1145 = vadd.f32 %v1113, %v1129
          %v1146 = vadd.f32 %v1114, %v1130
          %v1147 = vadd.f32 %v1115, %v1131
          %v1148 = vadd.f32 %v1116, %v1132
          %v1149 = vadd.f32 %v1117, %v1133
          %v1150 = vadd.f32 %v1118, %v1134
          %v1151 = vadd.f32 %v1119, %v1135
          %v1152 = vadd.f32 %v1120, %v1136
          %v1153 = vadd.f32 %v1121, %v1137
          %v1154 = vadd.f32 %v1122, %v1138
          %v1155 = vld [vmem:[%s479] sm:$0x1]
          %v1156 = vld [vmem:[%s479 + $0x1] sm:$0x1]
          %v1157 = vld [vmem:[%s479 + $0x2] sm:$0x1]
          %v1158 = vld [vmem:[%s479 + $0x3] sm:$0x1]
          %v1159 = vpack.c.bf16 %v1140, %v1139
          %v1160 = vpack.c.bf16 %v1142, %v1141
          %v1161 = vpack.c.bf16 %v1144, %v1143
          %v1162 = vpack.c.bf16 %v1146, %v1145
          %v1163 = vpack.c.bf16 %v1148, %v1147
          %v1164 = vpack.c.bf16 %v1150, %v1149
          %v1165 = vpack.c.bf16 %v1152, %v1151
          %v1166 = vpack.c.bf16 %v1154, %v1153
          %v1167 = vld [vmem:[%s461] sm:$0xf]
          %v1168 = vld [vmem:[%s461 + $0x4] sm:$0xf]
          %v1169 = vld [vmem:[%s461 + $0x8] sm:$0xf]
          %v1170 = vld [vmem:[%s461 + $0xc] sm:$0xf]
          %v1171 = vld [vmem:[%s461 + $0x10] sm:$0xf]
          %v1172 = vld [vmem:[%s461 + $0x14] sm:$0xf]
          %v1173 = vld [vmem:[%s461 + $0x18] sm:$0xf]
          %v1174 = vld [vmem:[%s461 + $0x1c] sm:$0xf]
          %v1175 = vld [vmem:[%s461 + $0x20] sm:$0xf]
          %v1176 = vld [vmem:[%s461 + $0x24] sm:$0xf]
          %v1177 = vld [vmem:[%s461 + $0x28] sm:$0xf]
          %v1178 = vld [vmem:[%s461 + $0x2c] sm:$0xf]
          %v1179 = vld [vmem:[%s461 + $0x30] sm:$0xf]
          %v1180 = vld [vmem:[%s461 + $0x34] sm:$0xf]
          %v1181 = vld [vmem:[%s461 + $0x38] sm:$0xf]
          %v1182 = vld [vmem:[%s461 + $0x3c] sm:$0xf]
          %v1183 = vlaneseq
          %v1184 = vshrl.u32 %v1183, 7
          %v1185 = vsub.s32 0, %v1184
          %v1186 = vrot.slane %v1155, %v1185
          %v1203 = vunpack.c.l.b16 %v1167
          %v1204 = vunpack.c.l.b16 %v1168
          %v1205 = vunpack.c.l.b16 %v1169
          %v1206 = vunpack.c.l.b16 %v1170
          %v1207 = vunpack.c.l.b16 %v1171
          %v1208 = vunpack.c.l.b16 %v1172
          %v1209 = vunpack.c.l.b16 %v1173
          %v1210 = vunpack.c.l.b16 %v1174
          %v1211 = vunpack.c.l.b16 %v1175
          %v1212 = vunpack.c.l.b16 %v1176
          %v1213 = vunpack.c.l.b16 %v1177
          %v1214 = vunpack.c.l.b16 %v1178
          %v1215 = vunpack.c.l.b16 %v1179
          %v1216 = vunpack.c.l.b16 %v1180
          %v1217 = vunpack.c.l.b16 %v1181
          %v1218 = vunpack.c.l.b16 %v1182
          %v1219 = vpack.c.b16 %v1204, %v1203
          %v1220 = vpack.c.b16 %v1206, %v1205
          %v1221 = vpack.c.b16 %v1208, %v1207
          %v1222 = vpack.c.b16 %v1210, %v1209
          %v1223 = vpack.c.b16 %v1212, %v1211
          %v1224 = vpack.c.b16 %v1214, %v1213
          %v1225 = vpack.c.b16 %v1216, %v1215
          %v1226 = vpack.c.b16 %v1218, %v1217
          %1235 = vmatprep.subr.bf16.mxu0 0
          %1236 = vmatpush1.bf16.msra.mxu0 %v1219
          %1237 = vmatprep.subr.bf16.mxu0 0
          %1238 = vmatpush1.bf16.msra.mxu0 %v1220
          %1239 = vmatprep.subr.bf16.mxu0 0
          %1240 = vmatpush1.bf16.msra.mxu0 %v1221
          %1241 = vmatprep.subr.bf16.mxu0 0
          %1242 = vmatpush1.bf16.msra.mxu0 %v1222
          %1243 = vmatprep.subr.bf16.mxu0 0
          %1244 = vmatpush1.bf16.msra.mxu0 %v1223
          %1245 = vmatprep.subr.bf16.mxu0 0
          %1246 = vmatpush1.bf16.msra.mxu0 %v1224
          %1247 = vmatprep.subr.bf16.mxu0 0
          %1248 = vmatpush1.bf16.msra.mxu0 %v1225
          %1249 = vmatprep.subr.bf16.mxu0 0
          %1250 = vmatpush1.bf16.msra.mxu0 %v1226
          %1251 = vmatprep.subr.bf16.mxu0 0
          %1252 = vmatpush1.bf16.msra.mxu0 0
          %1253 = vmatprep.subr.bf16.mxu0 0
          %1254 = vmatpush1.bf16.msra.mxu0 0
          %1255 = vmatprep.subr.bf16.mxu0 0
          %1256 = vmatpush1.bf16.msra.mxu0 0
          %1257 = vmatprep.subr.bf16.mxu0 0
          %1258 = vmatpush1.bf16.msra.mxu0 0
          %1259 = vmatprep.subr.bf16.mxu0 0
          %1260 = vmatpush1.bf16.msra.mxu0 0
          %1261 = vmatprep.subr.bf16.mxu0 0
          %1262 = vmatpush1.bf16.msra.mxu0 0
          %1263 = vmatprep.subr.bf16.mxu0 0
          %1264 = vmatpush1.bf16.msra.mxu0 0
          %1265 = vmatprep.subr.bf16.mxu0 0
          %1266 = vmatpush1.bf16.msra.mxu0 0
          %1267 = vmatprep.mubr.bf16.mxu0 0
          %1268 = vmatmul.mubr.bf16.gmra.mrb[0].mxu0 %v1159
          %v1269 = vpop.f32.mrb[0].mxu0
          %v1270 = vadd.f32 %v1186, %v1269
          %v1271 = vpop.f32.mrb[0].mxu0
          %v1272 = vpop.f32.mrb[0].mxu0
          %v1273 = vadd.f32 %v1186, %v1272
          %v1274 = vpop.f32.mrb[0].mxu0
          %1275 = vmatprep.mubr.bf16.mxu0 0
          %1276 = vmatmul.mubr.bf16.gmra.mrb[0].mxu0 %v1160
          %v1277 = vpop.f32.mrb[0].mxu0
          %v1278 = vadd.f32 %v1186, %v1277
          %v1279 = vpop.f32.mrb[0].mxu0
          %v1280 = vpop.f32.mrb[0].mxu0
          %v1281 = vadd.f32 %v1186, %v1280
          %v1282 = vpop.f32.mrb[0].mxu0
          %1283 = vmatprep.mubr.bf16.mxu0 0
          %1284 = vmatmul.mubr.bf16.gmra.mrb[0].mxu0 %v1161
          %v1285 = vpop.f32.mrb[0].mxu0
          %v1286 = vadd.f32 %v1186, %v1285
          %v1287 = vpop.f32.mrb[0].mxu0
          %v1288 = vpop.f32.mrb[0].mxu0
          %v1289 = vadd.f32 %v1186, %v1288
          %v1290 = vpop.f32.mrb[0].mxu0
          %1291 = vmatprep.mubr.bf16.mxu0 0
          %1292 = vmatmul.mubr.bf16.gmra.mrb[0].mxu0 %v1162
          %v1293 = vpop.f32.mrb[0].mxu0
          %v1294 = vadd.f32 %v1186, %v1293
          %v1295 = vpop.f32.mrb[0].mxu0
          %v1296 = vpop.f32.mrb[0].mxu0
          %v1297 = vadd.f32 %v1186, %v1296
          %v1298 = vpop.f32.mrb[0].mxu0
          %1299 = vmatprep.mubr.bf16.mxu0 0
          %1300 = vmatmul.mubr.bf16.gmra.mrb[0].mxu0 %v1163
          %v1301 = vpop.f32.mrb[0].mxu0
          %v1302 = vadd.f32 %v1186, %v1301
          %v1303 = vpop.f32.mrb[0].mxu0
          %v1304 = vpop.f32.mrb[0].mxu0
          %v1305 = vadd.f32 %v1186, %v1304
          %v1306 = vpop.f32.mrb[0].mxu0
          %1307 = vmatprep.mubr.bf16.mxu0 0
          %1308 = vmatmul.mubr.bf16.gmra.mrb[0].mxu0 %v1164
          %v1309 = vpop.f32.mrb[0].mxu0
          %v1310 = vadd.f32 %v1186, %v1309
          %v1311 = vpop.f32.mrb[0].mxu0
          %v1312 = vpop.f32.mrb[0].mxu0
          %v1313 = vadd.f32 %v1186, %v1312
          %v1314 = vpop.f32.mrb[0].mxu0
          %1315 = vmatprep.mubr.bf16.mxu0 0
          %1316 = vmatmul.mubr.bf16.gmra.mrb[0].mxu0 %v1165
          %v1317 = vpop.f32.mrb[0].mxu0
          %v1318 = vadd.f32 %v1186, %v1317
          %v1319 = vpop.f32.mrb[0].mxu0
          %v1320 = vpop.f32.mrb[0].mxu0
          %v1321 = vadd.f32 %v1186, %v1320
          %v1322 = vpop.f32.mrb[0].mxu0
          %1323 = vmatprep.mubr.bf16.mxu0 0
          %1324 = vmatmul.mubr.bf16.gmra.mrb[0].mxu0 %v1166
          %v1325 = vpop.f32.mrb[0].mxu0
          %v1326 = vadd.f32 %v1186, %v1325
          %v1327 = vpop.f32.mrb[0].mxu0
          %v1328 = vpop.f32.mrb[0].mxu0
          %v1329 = vadd.f32 %v1186, %v1328
          %v1330 = vpop.f32.mrb[0].mxu0
          %1331 = vdwg.mxu0
          %v1332 = vmax.f32 %v1270, 0.0
          %v1333 = vmax.f32 %v1273, 0.0
          %v1334 = vmax.f32 %v1278, 0.0
          %v1335 = vmax.f32 %v1281, 0.0
          %v1336 = vmax.f32 %v1286, 0.0
          %v1337 = vmax.f32 %v1289, 0.0
          %v1338 = vmax.f32 %v1294, 0.0
          %v1339 = vmax.f32 %v1297, 0.0
          %v1340 = vmax.f32 %v1302, 0.0
          %v1341 = vmax.f32 %v1305, 0.0
          %v1342 = vmax.f32 %v1310, 0.0
          %v1343 = vmax.f32 %v1313, 0.0
          %v1344 = vmax.f32 %v1318, 0.0
          %v1345 = vmax.f32 %v1321, 0.0
          %v1346 = vmax.f32 %v1326, 0.0
          %v1347 = vmax.f32 %v1329, 0.0
          %v1348 = vpack.c.bf16 %v1333, %v1332
          %v1349 = vpack.c.bf16 %v1335, %v1334
          %v1350 = vpack.c.bf16 %v1337, %v1336
          %v1351 = vpack.c.bf16 %v1339, %v1338
          %v1352 = vpack.c.bf16 %v1341, %v1340
          %v1353 = vpack.c.bf16 %v1343, %v1342
          %v1354 = vpack.c.bf16 %v1345, %v1344
          %v1355 = vpack.c.bf16 %v1347, %v1346
          %v1356 = vld [vmem:[%s470] sm:$0xf]
          %v1357 = vld [vmem:[%s470 + $0x4] sm:$0xf]
          %v1358 = vld [vmem:[%s470 + $0x8] sm:$0xf]
          %v1359 = vld [vmem:[%s470 + $0xc] sm:$0xf]
          %v1360 = vld [vmem:[%s470 + $0x10] sm:$0xf]
          %v1361 = vld [vmem:[%s470 + $0x14] sm:$0xf]
          %v1362 = vld [vmem:[%s470 + $0x18] sm:$0xf]
          %v1363 = vld [vmem:[%s470 + $0x1c] sm:$0xf]
          %v1364 = vld [vmem:[%s470 + $0x20] sm:$0xf]
          %v1365 = vld [vmem:[%s470 + $0x24] sm:$0xf]
          %v1366 = vld [vmem:[%s470 + $0x28] sm:$0xf]
          %v1367 = vld [vmem:[%s470 + $0x2c] sm:$0xf]
          %v1368 = vld [vmem:[%s470 + $0x30] sm:$0xf]
          %v1369 = vld [vmem:[%s470 + $0x34] sm:$0xf]
          %v1370 = vld [vmem:[%s470 + $0x38] sm:$0xf]
          %v1371 = vld [vmem:[%s470 + $0x3c] sm:$0xf]
          %v1372 = vlaneseq
          %v1373 = vshrl.u32 %v1372, 7
          %v1374 = vsub.s32 0, %v1373
          %v1375 = vrot.slane %v1156, %v1374
          %v1392 = vunpack.c.l.b16 %v1356
          %v1393 = vunpack.c.l.b16 %v1357
          %v1394 = vunpack.c.l.b16 %v1358
          %v1395 = vunpack.c.l.b16 %v1359
          %v1396 = vunpack.c.l.b16 %v1360
          %v1397 = vunpack.c.l.b16 %v1361
          %v1398 = vunpack.c.l.b16 %v1362
          %v1399 = vunpack.c.l.b16 %v1363
          %v1400 = vunpack.c.l.b16 %v1364
          %v1401 = vunpack.c.l.b16 %v1365
          %v1402 = vunpack.c.l.b16 %v1366
          %v1403 = vunpack.c.l.b16 %v1367
          %v1404 = vunpack.c.l.b16 %v1368
          %v1405 = vunpack.c.l.b16 %v1369
          %v1406 = vunpack.c.l.b16 %v1370
          %v1407 = vunpack.c.l.b16 %v1371
          %v1408 = vpack.c.b16 %v1393, %v1392
          %v1409 = vpack.c.b16 %v1395, %v1394
          %v1410 = vpack.c.b16 %v1397, %v1396
          %v1411 = vpack.c.b16 %v1399, %v1398
          %v1412 = vpack.c.b16 %v1401, %v1400
          %v1413 = vpack.c.b16 %v1403, %v1402
          %v1414 = vpack.c.b16 %v1405, %v1404
          %v1415 = vpack.c.b16 %v1407, %v1406
          %1424 = vmatprep.subr.bf16.mxu0 0
          %1425 = vmatpush1.bf16.msra.mxu0 %v1408
          %1426 = vmatprep.subr.bf16.mxu0 0
          %1427 = vmatpush1.bf16.msra.mxu0 %v1409
          %1428 = vmatprep.subr.bf16.mxu0 0
          %1429 = vmatpush1.bf16.msra.mxu0 %v1410
          %1430 = vmatprep.subr.bf16.mxu0 0
          %1431 = vmatpush1.bf16.msra.mxu0 %v1411
          %1432 = vmatprep.subr.bf16.mxu0 0
          %1433 = vmatpush1.bf16.msra.mxu0 %v1412
          %1434 = vmatprep.subr.bf16.mxu0 0
          %1435 = vmatpush1.bf16.msra.mxu0 %v1413
          %1436 = vmatprep.subr.bf16.mxu0 0
          %1437 = vmatpush1.bf16.msra.mxu0 %v1414
          %1438 = vmatprep.subr.bf16.mxu0 0
          %1439 = vmatpush1.bf16.msra.mxu0 %v1415
          %1440 = vmatprep.subr.bf16.mxu0 0
          %1441 = vmatpush1.bf16.msra.mxu0 0
          %1442 = vmatprep.subr.bf16.mxu0 0
          %1443 = vmatpush1.bf16.msra.mxu0 0
          %1444 = vmatprep.subr.bf16.mxu0 0
          %1445 = vmatpush1.bf16.msra.mxu0 0
          %1446 = vmatprep.subr.bf16.mxu0 0
          %1447 = vmatpush1.bf16.msra.mxu0 0
          %1448 = vmatprep.subr.bf16.mxu0 0
          %1449 = vmatpush1.bf16.msra.mxu0 0
          %1450 = vmatprep.subr.bf16.mxu0 0
          %1451 = vmatpush1.bf16.msra.mxu0 0
          %1452 = vmatprep.subr.bf16.mxu0 0
          %1453 = vmatpush1.bf16.msra.mxu0 0
          %1454 = vmatprep.subr.bf16.mxu0 0
          %1455 = vmatpush1.bf16.msra.mxu0 0
          %1456 = vmatprep.mubr.bf16.mxu0 0
          %1457 = vmatmul.mubr.bf16.gmra.mrb[0].mxu0 %v1348
          %v1458 = vpop.f32.mrb[0].mxu0
          %v1459 = vadd.f32 %v1375, %v1458
          %v1460 = vpop.f32.mrb[0].mxu0
          %v1461 = vpop.f32.mrb[0].mxu0
          %v1462 = vadd.f32 %v1375, %v1461
          %v1463 = vpop.f32.mrb[0].mxu0
          %1464 = vmatprep.mubr.bf16.mxu0 0
          %1465 = vmatmul.mubr.bf16.gmra.mrb[0].mxu0 %v1349
          %v1466 = vpop.f32.mrb[0].mxu0
          %v1467 = vadd.f32 %v1375, %v1466
          %v1468 = vpop.f32.mrb[0].mxu0
          %v1469 = vpop.f32.mrb[0].mxu0
          %v1470 = vadd.f32 %v1375, %v1469
          %v1471 = vpop.f32.mrb[0].mxu0
          %1472 = vmatprep.mubr.bf16.mxu0 0
          %1473 = vmatmul.mubr.bf16.gmra.mrb[0].mxu0 %v1350
          %v1474 = vpop.f32.mrb[0].mxu0
          %v1475 = vadd.f32 %v1375, %v1474
          %v1476 = vpop.f32.mrb[0].mxu0
          %v1477 = vpop.f32.mrb[0].mxu0
          %v1478 = vadd.f32 %v1375, %v1477
          %v1479 = vpop.f32.mrb[0].mxu0
          %1480 = vmatprep.mubr.bf16.mxu0 0
          %1481 = vmatmul.mubr.bf16.gmra.mrb[0].mxu0 %v1351
          %v1482 = vpop.f32.mrb[0].mxu0
          %v1483 = vadd.f32 %v1375, %v1482
          %v1484 = vpop.f32.mrb[0].mxu0
          %v1485 = vpop.f32.mrb[0].mxu0
          %v1486 = vadd.f32 %v1375, %v1485
          %v1487 = vpop.f32.mrb[0].mxu0
          %1488 = vmatprep.mubr.bf16.mxu0 0
          %1489 = vmatmul.mubr.bf16.gmra.mrb[0].mxu0 %v1352
          %v1490 = vpop.f32.mrb[0].mxu0
          %v1491 = vadd.f32 %v1375, %v1490
          %v1492 = vpop.f32.mrb[0].mxu0
          %v1493 = vpop.f32.mrb[0].mxu0
          %v1494 = vadd.f32 %v1375, %v1493
          %v1495 = vpop.f32.mrb[0].mxu0
          %1496 = vmatprep.mubr.bf16.mxu0 0
          %1497 = vmatmul.mubr.bf16.gmra.mrb[0].mxu0 %v1353
          %v1498 = vpop.f32.mrb[0].mxu0
          %v1499 = vadd.f32 %v1375, %v1498
          %v1500 = vpop.f32.mrb[0].mxu0
          %v1501 = vpop.f32.mrb[0].mxu0
          %v1502 = vadd.f32 %v1375, %v1501
          %v1503 = vpop.f32.mrb[0].mxu0
          %1504 = vmatprep.mubr.bf16.mxu0 0
          %1505 = vmatmul.mubr.bf16.gmra.mrb[0].mxu0 %v1354
          %v1506 = vpop.f32.mrb[0].mxu0
          %v1507 = vadd.f32 %v1375, %v1506
          %v1508 = vpop.f32.mrb[0].mxu0
          %v1509 = vpop.f32.mrb[0].mxu0
          %v1510 = vadd.f32 %v1375, %v1509
          %v1511 = vpop.f32.mrb[0].mxu0
          %1512 = vmatprep.mubr.bf16.mxu0 0
          %1513 = vmatmul.mubr.bf16.gmra.mrb[0].mxu0 %v1355
          %v1514 = vpop.f32.mrb[0].mxu0
          %v1515 = vadd.f32 %v1375, %v1514
          %v1516 = vpop.f32.mrb[0].mxu0
          %v1517 = vpop.f32.mrb[0].mxu0
          %v1518 = vadd.f32 %v1375, %v1517
          %v1519 = vpop.f32.mrb[0].mxu0
          %1520 = vdwg.mxu0
          %v1521 = vstv %s38
          %vm1522 = vcmp.eq.s32.totalorder %v611, %v1521
          %v1523 = vsel %vm1522, 1.0, 0.0
          %vm1524 = vcmp.eq.s32.totalorder %v611, 3
          %v1525 = vsel %vm1524, 1.0, 0.0
          %v1526 = vld [vmem:[#allocation16] sm:$0xff]
          %v1527 = vld [vmem:[#allocation16 + $0x8] sm:$0xff]
          %v1528 = vld [vmem:[#allocation16 + $0x10] sm:$0xff]
          %v1529 = vld [vmem:[#allocation16 + $0x18] sm:$0xff]
          %v1530 = vld [vmem:[#allocation16 + $0x20] sm:$0xff]
          %v1531 = vld [vmem:[#allocation16 + $0x28] sm:$0xff]
          %v1532 = vld [vmem:[#allocation16 + $0x30] sm:$0xff]
          %v1533 = vld [vmem:[#allocation16 + $0x38] sm:$0xff]
          %v1534 = vld [vmem:[#allocation16 + $0x40] sm:$0xff]
          %v1535 = vld [vmem:[#allocation16 + $0x48] sm:$0xff]
          %v1536 = vld [vmem:[#allocation16 + $0x50] sm:$0xff]
          %v1537 = vld [vmem:[#allocation16 + $0x58] sm:$0xff]
          %v1538 = vld [vmem:[#allocation16 + $0x60] sm:$0xff]
          %v1539 = vld [vmem:[#allocation16 + $0x68] sm:$0xff]
          %v1540 = vld [vmem:[#allocation16 + $0x70] sm:$0xff]
          %v1541 = vld [vmem:[#allocation16 + $0x78] sm:$0xff]
          %v1542 = vmul.f32 %v1526, %v1523
          %v1543 = vmul.f32 %v1527, %v1523
          %v1544 = vmul.f32 %v1528, %v1523
          %v1545 = vmul.f32 %v1529, %v1523
          %v1546 = vmul.f32 %v1530, %v1523
          %v1547 = vmul.f32 %v1531, %v1523
          %v1548 = vmul.f32 %v1532, %v1523
          %v1549 = vmul.f32 %v1533, %v1523
          %v1550 = vmul.f32 %v1534, %v1523
          %v1551 = vmul.f32 %v1535, %v1523
          %v1552 = vmul.f32 %v1536, %v1523
          %v1553 = vmul.f32 %v1537, %v1523
          %v1554 = vmul.f32 %v1538, %v1523
          %v1555 = vmul.f32 %v1539, %v1523
          %v1556 = vmul.f32 %v1540, %v1523
          %v1557 = vmul.f32 %v1541, %v1523
          %1558 = vadd.xlane.f32.xlu0 %v1542
          %v1559 = vpop.xlane.xlu0 %1558
          %1560 = vadd.xlane.f32.xlu0 %v1543
          %v1561 = vpop.xlane.xlu0 %1560
          %1562 = vadd.xlane.f32.xlu0 %v1544
          %v1563 = vpop.xlane.xlu0 %1562
          %1564 = vadd.xlane.f32.xlu0 %v1545
          %v1565 = vpop.xlane.xlu0 %1564
          %1566 = vadd.xlane.f32.xlu0 %v1546
          %v1567 = vpop.xlane.xlu0 %1566
          %1568 = vadd.xlane.f32.xlu0 %v1547
          %v1569 = vpop.xlane.xlu0 %1568
          %1570 = vadd.xlane.f32.xlu0 %v1548
          %v1571 = vpop.xlane.xlu0 %1570
          %1572 = vadd.xlane.f32.xlu0 %v1549
          %v1573 = vpop.xlane.xlu0 %1572
          %1574 = vadd.xlane.f32.xlu0 %v1550
          %v1575 = vpop.xlane.xlu0 %1574
          %1576 = vadd.xlane.f32.xlu0 %v1551
          %v1577 = vpop.xlane.xlu0 %1576
          %1578 = vadd.xlane.f32.xlu0 %v1552
          %v1579 = vpop.xlane.xlu0 %1578
          %1580 = vadd.xlane.f32.xlu0 %v1553
          %v1581 = vpop.xlane.xlu0 %1580
          %1582 = vadd.xlane.f32.xlu0 %v1554
          %v1583 = vpop.xlane.xlu0 %1582
          %1584 = vadd.xlane.f32.xlu0 %v1555
          %v1585 = vpop.xlane.xlu0 %1584
          %1586 = vadd.xlane.f32.xlu0 %v1556
          %v1587 = vpop.xlane.xlu0 %1586
          %1588 = vadd.xlane.f32.xlu0 %v1557
          %v1589 = vpop.xlane.xlu0 %1588
          %v1590 = vmul.f32 %v1526, %v1525
          %v1591 = vmul.f32 %v1527, %v1525
          %v1592 = vmul.f32 %v1528, %v1525
          %v1593 = vmul.f32 %v1529, %v1525
          %v1594 = vmul.f32 %v1530, %v1525
          %v1595 = vmul.f32 %v1531, %v1525
          %v1596 = vmul.f32 %v1532, %v1525
          %v1597 = vmul.f32 %v1533, %v1525
          %v1598 = vmul.f32 %v1534, %v1525
          %v1599 = vmul.f32 %v1535, %v1525
          %v1600 = vmul.f32 %v1536, %v1525
          %v1601 = vmul.f32 %v1537, %v1525
          %v1602 = vmul.f32 %v1538, %v1525
          %v1603 = vmul.f32 %v1539, %v1525
          %v1604 = vmul.f32 %v1540, %v1525
          %v1605 = vmul.f32 %v1541, %v1525
          %1606 = vadd.xlane.f32.xlu0 %v1590
          %v1607 = vpop.xlane.xlu0 %1606
          %1608 = vadd.xlane.f32.xlu0 %v1591
          %v1609 = vpop.xlane.xlu0 %1608
          %1610 = vadd.xlane.f32.xlu0 %v1592
          %v1611 = vpop.xlane.xlu0 %1610
          %1612 = vadd.xlane.f32.xlu0 %v1593
          %v1613 = vpop.xlane.xlu0 %1612
          %1614 = vadd.xlane.f32.xlu0 %v1594
          %v1615 = vpop.xlane.xlu0 %1614
          %1616 = vadd.xlane.f32.xlu0 %v1595
          %v1617 = vpop.xlane.xlu0 %1616
          %1618 = vadd.xlane.f32.xlu0 %v1596
          %v1619 = vpop.xlane.xlu0 %1618
          %1620 = vadd.xlane.f32.xlu0 %v1597
          %v1621 = vpop.xlane.xlu0 %1620
          %1622 = vadd.xlane.f32.xlu0 %v1598
          %v1623 = vpop.xlane.xlu0 %1622
          %1624 = vadd.xlane.f32.xlu0 %v1599
          %v1625 = vpop.xlane.xlu0 %1624
          %1626 = vadd.xlane.f32.xlu0 %v1600
          %v1627 = vpop.xlane.xlu0 %1626
          %1628 = vadd.xlane.f32.xlu0 %v1601
          %v1629 = vpop.xlane.xlu0 %1628
          %1630 = vadd.xlane.f32.xlu0 %v1602
          %v1631 = vpop.xlane.xlu0 %1630
          %1632 = vadd.xlane.f32.xlu0 %v1603
          %v1633 = vpop.xlane.xlu0 %1632
          %1634 = vadd.xlane.f32.xlu0 %v1604
          %v1635 = vpop.xlane.xlu0 %1634
          %1636 = vadd.xlane.f32.xlu0 %v1605
          %v1637 = vpop.xlane.xlu0 %1636
          %v1638 = vmul.f32 %v1559, %v1459
          %v1639 = vmul.f32 %v1561, %v1462
          %v1640 = vmul.f32 %v1563, %v1467
          %v1641 = vmul.f32 %v1565, %v1470
          %v1642 = vmul.f32 %v1567, %v1475
          %v1643 = vmul.f32 %v1569, %v1478
          %v1644 = vmul.f32 %v1571, %v1483
          %v1645 = vmul.f32 %v1573, %v1486
          %v1646 = vmul.f32 %v1575, %v1491
          %v1647 = vmul.f32 %v1577, %v1494
          %v1648 = vmul.f32 %v1579, %v1499
          %v1649 = vmul.f32 %v1581, %v1502
          %v1650 = vmul.f32 %v1583, %v1507
          %v1651 = vmul.f32 %v1585, %v1510
          %v1652 = vmul.f32 %v1587, %v1515
          %v1653 = vmul.f32 %v1589, %v1518
          %v1654 = vadd.f32 %v1638, %v578
          %v1655 = vadd.f32 %v1639, %v579
          %v1656 = vadd.f32 %v1640, %v580
          %v1657 = vadd.f32 %v1641, %v581
          %v1658 = vadd.f32 %v1642, %v582
          %v1659 = vadd.f32 %v1643, %v583
          %v1660 = vadd.f32 %v1644, %v584
          %v1661 = vadd.f32 %v1645, %v585
          %v1662 = vadd.f32 %v1646, %v586
          %v1663 = vadd.f32 %v1647, %v587
          %v1664 = vadd.f32 %v1648, %v588
          %v1665 = vadd.f32 %v1649, %v589
          %v1666 = vadd.f32 %v1650, %v590
          %v1667 = vadd.f32 %v1651, %v591
          %v1668 = vadd.f32 %v1652, %v592
          %v1669 = vadd.f32 %v1653, %v593
          %v1670 = vadd.f32 %v1654, %v1655
          %v1671 = vadd.f32 %v1670, %v1656
          %v1672 = vadd.f32 %v1671, %v1657
          %v1673 = vadd.f32 %v1672, %v1658
          %v1674 = vadd.f32 %v1673, %v1659
          %v1675 = vadd.f32 %v1674, %v1660
          %v1676 = vadd.f32 %v1675, %v1661
          %v1677 = vadd.f32 %v1676, %v1662
          %v1678 = vadd.f32 %v1677, %v1663
          %v1679 = vadd.f32 %v1678, %v1664
          %v1680 = vadd.f32 %v1679, %v1665
          %v1681 = vadd.f32 %v1680, %v1666
          %v1682 = vadd.f32 %v1681, %v1667
          %v1683 = vadd.f32 %v1682, %v1668
          %v1684 = vadd.f32 %v1683, %v1669
          %v1685 = vrot.slane %v1684, 4
          %v1686 = vadd.f32 %v1684, %v1685
          %v1687 = vrot.slane %v1686, 2
          %v1688 = vadd.f32 %v1686, %v1687
          %v1689 = vrot.slane %v1688, 1
          %v1690 = vadd.f32 %v1688, %v1689
          %v1691 = vmul.f32 %v1690, 0.020833334
          %v1692 = vmul.f32 %v1654, %v1654
          %v1693 = vmul.f32 %v1655, %v1655
          %v1694 = vmul.f32 %v1656, %v1656
          %v1695 = vmul.f32 %v1657, %v1657
          %v1696 = vmul.f32 %v1658, %v1658
          %v1697 = vmul.f32 %v1659, %v1659
          %v1698 = vmul.f32 %v1660, %v1660
          %v1699 = vmul.f32 %v1661, %v1661
          %v1700 = vmul.f32 %v1662, %v1662
          %v1701 = vmul.f32 %v1663, %v1663
          %v1702 = vmul.f32 %v1664, %v1664
          %v1703 = vmul.f32 %v1665, %v1665
          %v1704 = vmul.f32 %v1666, %v1666
          %v1705 = vmul.f32 %v1667, %v1667
          %v1706 = vmul.f32 %v1668, %v1668
          %v1707 = vmul.f32 %v1669, %v1669
          %v1708 = vadd.f32 %v1692, %v1693
          %v1709 = vadd.f32 %v1708, %v1694
          %v1710 = vadd.f32 %v1709, %v1695
          %v1711 = vadd.f32 %v1710, %v1696
          %v1712 = vadd.f32 %v1711, %v1697
          %v1713 = vadd.f32 %v1712, %v1698
          %v1714 = vadd.f32 %v1713, %v1699
          %v1715 = vadd.f32 %v1714, %v1700
          %v1716 = vadd.f32 %v1715, %v1701
          %v1717 = vadd.f32 %v1716, %v1702
          %v1718 = vadd.f32 %v1717, %v1703
          %v1719 = vadd.f32 %v1718, %v1704
          %v1720 = vadd.f32 %v1719, %v1705
          %v1721 = vadd.f32 %v1720, %v1706
          %v1722 = vadd.f32 %v1721, %v1707
          %v1723 = vrot.slane %v1722, 4
          %v1724 = vadd.f32 %v1722, %v1723
          %v1725 = vrot.slane %v1724, 2
          %v1726 = vadd.f32 %v1724, %v1725
          %v1727 = vrot.slane %v1726, 1
          %v1728 = vadd.f32 %v1726, %v1727
          %v1729 = vmul.f32 %v1728, 0.020833334
          %v1730 = vmul.f32 %v1691, %v1691
          %v1731 = vsub.f32 %v1729, %v1730
          %v1732 = vadd.f32 %v1731, 1e-05
          %v1733 = vrsqrt.pop %v1732
          %v1734 = vmul.f32 %v1157, %v1733
          %v1735 = vmul.f32 %v1691, %v1734
          %v1736 = vsub.f32 %v1158, %v1735
          %v1737 = vlaneseq
          %v1738 = vshrl.u32 %v1737, 7
          %v1739 = vsub.s32 0, %v1738
          %v1740 = vrot.slane %v1734, %v1739
          %v1741 = vmul.f32 %v1654, %v1740
          %v1742 = vmul.f32 %v1655, %v1740
          %v1743 = vmul.f32 %v1656, %v1740
          %v1744 = vmul.f32 %v1657, %v1740
          %v1745 = vmul.f32 %v1658, %v1740
          %v1746 = vmul.f32 %v1659, %v1740
          %v1747 = vmul.f32 %v1660, %v1740
          %v1748 = vmul.f32 %v1661, %v1740
          %v1749 = vmul.f32 %v1662, %v1740
          %v1750 = vmul.f32 %v1663, %v1740
          %v1751 = vmul.f32 %v1664, %v1740
          %v1752 = vmul.f32 %v1665, %v1740
          %v1753 = vmul.f32 %v1666, %v1740
          %v1754 = vmul.f32 %v1667, %v1740
          %v1755 = vmul.f32 %v1668, %v1740
          %v1756 = vmul.f32 %v1669, %v1740
          %v1757 = vlaneseq
          %v1758 = vshrl.u32 %v1757, 7
          %v1759 = vsub.s32 0, %v1758
          %v1760 = vrot.slane %v1736, %v1759
          %v1761 = vadd.f32 %v1741, %v1760
          %v1762 = vadd.f32 %v1742, %v1760
          %v1763 = vadd.f32 %v1743, %v1760
          %v1764 = vadd.f32 %v1744, %v1760
          %v1765 = vadd.f32 %v1745, %v1760
          %v1766 = vadd.f32 %v1746, %v1760
          %v1767 = vadd.f32 %v1747, %v1760
          %v1768 = vadd.f32 %v1748, %v1760
          %v1769 = vadd.f32 %v1749, %v1760
          %v1770 = vadd.f32 %v1750, %v1760
          %v1771 = vadd.f32 %v1751, %v1760
          %v1772 = vadd.f32 %v1752, %v1760
          %v1773 = vadd.f32 %v1753, %v1760
          %v1774 = vadd.f32 %v1754, %v1760
          %v1775 = vadd.f32 %v1755, %v1760
          %v1776 = vadd.f32 %v1756, %v1760
          %v1777 = vmax.f32 %v1761, 0.0
          %v1778 = vmax.f32 %v1762, 0.0
          %v1779 = vmax.f32 %v1763, 0.0
          %v1780 = vmax.f32 %v1764, 0.0
          %v1781 = vmax.f32 %v1765, 0.0
          %v1782 = vmax.f32 %v1766, 0.0
          %v1783 = vmax.f32 %v1767, 0.0
          %v1784 = vmax.f32 %v1768, 0.0
          %v1785 = vmax.f32 %v1769, 0.0
          %v1786 = vmax.f32 %v1770, 0.0
          %v1787 = vmax.f32 %v1771, 0.0
          %v1788 = vmax.f32 %v1772, 0.0
          %v1789 = vmax.f32 %v1773, 0.0
          %v1790 = vmax.f32 %v1774, 0.0
          %v1791 = vmax.f32 %v1775, 0.0
          %v1792 = vmax.f32 %v1776, 0.0
          %v1793 = vmul.f32 %v1777, %v1607
          %v1794 = vmul.f32 %v1778, %v1609
          %v1795 = vmul.f32 %v1779, %v1611
          %v1796 = vmul.f32 %v1780, %v1613
          %v1797 = vmul.f32 %v1781, %v1615
          %v1798 = vmul.f32 %v1782, %v1617
          %v1799 = vmul.f32 %v1783, %v1619
          %v1800 = vmul.f32 %v1784, %v1621
          %v1801 = vmul.f32 %v1785, %v1623
          %v1802 = vmul.f32 %v1786, %v1625
          %v1803 = vmul.f32 %v1787, %v1627
          %v1804 = vmul.f32 %v1788, %v1629
          %v1805 = vmul.f32 %v1789, %v1631
          %v1806 = vmul.f32 %v1790, %v1633
          %v1807 = vmul.f32 %v1791, %v1635
          %v1808 = vmul.f32 %v1792, %v1637
          %1809 = vst [vmem:[#allocation17] sm:$0xff] %v1793
          %1810 = vst [vmem:[#allocation17 + $0x8] sm:$0xff] %v1794
          %1811 = vst [vmem:[#allocation17 + $0x10] sm:$0xff] %v1795
          %1812 = vst [vmem:[#allocation17 + $0x18] sm:$0xff] %v1796
          %1813 = vst [vmem:[#allocation17 + $0x20] sm:$0xff] %v1797
          %1814 = vst [vmem:[#allocation17 + $0x28] sm:$0xff] %v1798
          %1815 = vst [vmem:[#allocation17 + $0x30] sm:$0xff] %v1799
          %1816 = vst [vmem:[#allocation17 + $0x38] sm:$0xff] %v1800
          %1817 = vst [vmem:[#allocation17 + $0x40] sm:$0xff] %v1801
          %1818 = vst [vmem:[#allocation17 + $0x48] sm:$0xff] %v1802
          %1819 = vst [vmem:[#allocation17 + $0x50] sm:$0xff] %v1803
          %1820 = vst [vmem:[#allocation17 + $0x58] sm:$0xff] %v1804
          %1821 = vst [vmem:[#allocation17 + $0x60] sm:$0xff] %v1805
          %1822 = vst [vmem:[#allocation17 + $0x68] sm:$0xff] %v1806
          %1823 = vst [vmem:[#allocation17 + $0x70] sm:$0xff] %v1807
          %1824 = vst [vmem:[#allocation17 + $0x78] sm:$0xff] %v1808
        $region101: #{vgn_forward.1} parent=51 // pred_fallthru
          _
        // Predicated region
        $region102: #{vgn_forward.1} parent=51 // pred_check
          %p1825 = pneg %p257
        $region103: #{vgn_forward.1} parent=51 // pred_check_branch
          %1827 = sbr.rel (%p1825) target = $region105
        $region104: #{vgn_forward.1} parent=51 // pred_region
          %s1829 = ssub.s32 2048, 2048
          %1830 = vsyncadd [#allocation5], %s1829
          %s1831 = sshll.u32 [#allocation17], 4
          %s1832 = int_to_ptr.vmem [resolvable:$true] %s1831
          %1837 = dma.vmem_to_hbm [thread:$0]  %s1832, 2048, %s9, [#allocation5], 128, 128, 8
        $region105: #{vgn_forward.1} parent=51 // pred_fallthru
          _
        // Predicated region
        $region106: #{vgn_forward.1} parent=51 // pred_check
          %p1838 = pneg %p257
        $region107: #{vgn_forward.1} parent=51 // pred_check_branch
          %1840 = sbr.rel (%p1838) target = $region109
        $region108: #{vgn_forward.1} parent=51 // pred_region
          %1841 = dma.done [#allocation5], 2048
        $region109: #{vgn_forward.1} parent=51 // pred_fallthru
          _
      $region52: #{vgn_forward.1} parent=5 // pred_fallthru
        _
      %p1842 = scmp.le.s32.totalorder 2, %s29
      // Predicated region
      $region110: #{vgn_forward.1} parent=5 // pred_check
        %p1843 = pneg %p1842
      $region111: #{vgn_forward.1} parent=5 // pred_check_branch
        %1845 = sbr.rel (%p1843) target = $region113
      $region112: #{vgn_forward.1} parent=5 // pred_region
        %s1846 = ssub.s32 %s29, 2
      $region113: #{vgn_forward.1} parent=5 // pred_fallthru
        _
    $region6: #{vgn_forward.1} parent=1 // loop_footer
      %s33 = sadd.s32 1, %s29
    $region7: #{vgn_forward.1} parent=1 // loop_footer_branch
      %28 = sbr.rel target = $region3
    $region8: #{vgn_forward.1} parent=1 // loop_exit
      _
    %1847 = vsyncpa [#allocation4], 1
    %s1848 = scalar_lea.sflag [#allocation4], 1
    %1849 = vsyncpa %s1848, 1
    %1850 = vsyncpa [#allocation9], 1
    %s1851 = scalar_lea.sflag [#allocation9], 1
    %1852 = vsyncpa %s1851, 1
    %1853 = vsyncpa [#allocation12], 1
    %s1854 = scalar_lea.sflag [#allocation12], 1
    %1855 = vsyncpa %s1854, 1
    %1856 = vsyncpa [#allocation15], 1
    %s1857 = scalar_lea.sflag [#allocation15], 1
    %1858 = vsyncpa %s1857, 1
    %1859 = vsyncpa [#allocation5], 1
    %s1860 = scalar_lea.sflag [#allocation5], 1
    %1861 = vsyncpa %s1860, 1
    %1862 = vsyncpa [#allocation6], 1
    %s1863 = scalar_lea.sflag [#allocation6], 1
    %1864 = vsyncpa %s1863, 1

</llo_original>
